<compile_context>
chip_gen: v7x
topology: tpu7x:2x2x1
jax: 0.10.0
libtpu: 0.0.40
codegen_flags: <defaults>
</compile_context>

<pallas_src>
import functools
import math

import jax
import jax.numpy as jnp
from jax.experimental import pallas as pl
from jax.experimental.pallas import tpu as pltpu

BN_EPS = 1e-5
EXPANSION = 4
STAGE_CFG = ((64, 3, 1), (128, 8, 2), (256, 36, 2), (512, 3, 2))  # ResNet-152


def _rup(x, m):
    return -(-x // m) * m


# ----------------------------------------------------------------------------
# Fused tiled matmul kernel:  out = [relu]( (A @ B) * scale + shift [+ res] )
# A, B, res in bf16; accumulate in f32 VMEM scratch; lane-dense 128/256 tiles.
# ----------------------------------------------------------------------------
@functools.lru_cache(maxsize=None)
def _fused_matmul(M, K, N, has_res, relu, out_f32):
    Kp = _rup(K, 128)
    Np = _rup(N, 128)
    tk = next(t for t in (512, 384, 256, 128) if Kp % t == 0)
    tn = 256 if Np % 256 == 0 else 128
    tm = min(512, _rup(M, 8))
    Mp = _rup(M, tm)
    out_dtype = jnp.float32 if out_f32 else jnp.bfloat16

    def kernel(*refs):
        if has_res:
            a_ref, b_ref, s_ref, t_ref, r_ref, o_ref, acc_ref = refs
        else:
            a_ref, b_ref, s_ref, t_ref, o_ref, acc_ref = refs
        k = pl.program_id(2)

        @pl.when(k == 0)
        def _init():
            acc_ref[...] = jnp.zeros_like(acc_ref)

        acc_ref[...] += jnp.dot(a_ref[...], b_ref[...],
                                preferred_element_type=jnp.float32)

        @pl.when(k == pl.num_programs(2) - 1)
        def _finalize():
            y = acc_ref[...] * s_ref[...] + t_ref[...]
            if has_res:
                y = y + r_ref[...].astype(jnp.float32)
            if relu:
                y = jnp.maximum(y, 0.0)
            o_ref[...] = y.astype(o_ref.dtype)

    in_specs = [
        pl.BlockSpec((tm, tk), lambda i, j, k: (i, k)),
        pl.BlockSpec((tk, tn), lambda i, j, k: (k, j)),
        pl.BlockSpec((1, tn), lambda i, j, k: (0, j)),
        pl.BlockSpec((1, tn), lambda i, j, k: (0, j)),
    ]
    if has_res:
        in_specs.append(pl.BlockSpec((tm, tn), lambda i, j, k: (i, j)))

    call = pl.pallas_call(
        kernel,
        out_shape=jax.ShapeDtypeStruct((Mp, Np), out_dtype),
        grid_spec=pltpu.PrefetchScalarGridSpec(
            num_scalar_prefetch=0,
            grid=(Mp // tm, Np // tn, Kp // tk),
            in_specs=in_specs,
            out_specs=pl.BlockSpec((tm, tn), lambda i, j, k: (i, j)),
            scratch_shapes=[pltpu.VMEM((tm, tn), jnp.float32)],
        ),
        compiler_params=pltpu.CompilerParams(
            dimension_semantics=("parallel", "parallel", "arbitrary")),
    )

    def run(a, b, scale, shift, res=None):
        a = jnp.pad(a.astype(jnp.bfloat16), ((0, Mp - M), (0, Kp - K)))
        b = jnp.pad(b.astype(jnp.bfloat16), ((0, Kp - K), (0, Np - N)))
        scale = jnp.pad(scale.astype(jnp.float32).reshape(1, N),
                        ((0, 0), (0, Np - N)))
        shift = jnp.pad(shift.astype(jnp.float32).reshape(1, N),
                        ((0, 0), (0, Np - N)))
        args = [a, b, scale, shift]
        if has_res:
            args.append(jnp.pad(res.astype(jnp.bfloat16),
                                ((0, Mp - M), (0, Np - N))))
        return call(*args)[:M, :N]

    return run


# ----------------------------------------------------------------------------
# Conv + BN (+ residual) (+ ReLU): im2col / flatten glue around fused matmul,
# compiled once per (shape, flags) signature.
# ----------------------------------------------------------------------------
def _im2col(x, kh, kw, stride, pad):
    n, h, w, c = x.shape
    if pad:
        x = jnp.pad(x, ((0, 0), (pad, pad), (pad, pad), (0, 0)))
    ho = (h + 2 * pad - kh) // stride + 1
    wo = (w + 2 * pad - kw) // stride + 1
    cols = []
    for i in range(kh):
        for j in range(kw):
            cols.append(x[:, i:i + (ho - 1) * stride + 1:stride,
                            j:j + (wo - 1) * stride + 1:stride, :])
    patches = jnp.concatenate(cols, axis=-1)          # (n, ho, wo, kh*kw*c)
    return patches.reshape(n * ho * wo, kh * kw * c)


@functools.lru_cache(maxsize=None)
def _conv_bn_fn(n, h, w_in, cin, kh, kw, cout, stride, pad, relu, has_res):
    if kh == 1 and kw == 1 and pad == 0:
        ho = -(-h // stride)
        wo = -(-w_in // stride)
    else:
        ho = (h + 2 * pad - kh) // stride + 1
        wo = (w_in + 2 * pad - kw) // stride + 1
    M, K, N = n * ho * wo, kh * kw * cin, cout
    mm = _fused_matmul(M, K, N, has_res, relu, False)

    def _prep(x):
        x = x.astype(jnp.bfloat16)
        if kh == 1 and kw == 1 and pad == 0:
            if stride > 1:
                x = x[:, ::stride, ::stride, :]
            return x.reshape(M, K)
        return _im2col(x, kh, kw, stride, pad)

    if has_res:
        def run(x, wgt, gamma, beta, mean, var, res):
            a = _prep(x)
            scale = gamma * jax.lax.rsqrt(var + BN_EPS)
            shift = beta - mean * scale
            out = mm(a, wgt.reshape(K, N), scale, shift, res.reshape(M, N))
            return out.reshape(n, ho, wo, N)
    else:
        def run(x, wgt, gamma, beta, mean, var):
            a = _prep(x)
            scale = gamma * jax.lax.rsqrt(var + BN_EPS)
            shift = beta - mean * scale
            out = mm(a, wgt.reshape(K, N), scale, shift)
            return out.reshape(n, ho, wo, N)
    return jax.jit(run)


def conv_bn_act(x, w, bn, stride=1, pad=0, relu=True, residual=None):
    n, h, w_in, cin = x.shape
    kh, kw, _, cout = w.shape
    fn = _conv_bn_fn(n, h, w_in, cin, kh, kw, cout, stride, pad, relu,
                     residual is not None)
    if residual is not None:
        return fn(x, w, bn['gamma'], bn['beta'], bn['mean'], bn['var'], residual)
    return fn(x, w, bn['gamma'], bn['beta'], bn['mean'], bn['var'])


# ----------------------------------------------------------------------------
# Classifier (same fused matmul: scale=1, shift=bias) and pooling kernels
# ----------------------------------------------------------------------------
@functools.lru_cache(maxsize=None)
def _linear_fn(M, K, N):
    mm = _fused_matmul(M, K, N, False, False, True)

    def run(x, w, b):
        return mm(x, w, jnp.ones((N,), jnp.float32), b)
    return jax.jit(run)


def linear(x, w, b):
    return _linear_fn(x.shape[0], x.shape[1], w.shape[1])(x, w, b)


@functools.lru_cache(maxsize=None)
def _gap_fn(N, HW, C):
    Cp = _rup(C, 128)
    inv = 1.0 / HW

    def kernel(x_ref, o_ref):
        o_ref[...] = jnp.sum(x_ref[...].astype(jnp.float32), axis=1) * inv

    call = pl.pallas_call(
        kernel,
        out_shape=jax.ShapeDtypeStruct((N, Cp), jnp.float32),
        grid=(1,),
        in_specs=[pl.BlockSpec((N, HW, Cp), lambda i: (0, 0, 0))],
        out_specs=pl.BlockSpec((N, Cp), lambda i: (0, 0)),
    )

    def run(x):
        x = jnp.pad(x, ((0, 0), (0, 0), (0, Cp - C)))
        return call(x)[:, :C]
    return jax.jit(run)


def global_avg_pool(x):
    n, h, w, c = x.shape
    return _gap_fn(n, h * w, c)(x.reshape(n, h * w, c))


def maxpool_3x3_s2_p1(x):
    # TODO(synk): negligible-compute pooling kept as lax.reduce_window glue.
    return jax.lax.reduce_window(
        x, jnp.array(-jnp.inf, x.dtype), jax.lax.max,
        window_dimensions=(1, 3, 3, 1),
        window_strides=(1, 2, 2, 1),
        padding=((0, 0), (1, 1), (1, 1), (0, 0)))


# ----------------------------------------------------------------------------
# Deterministic synthetic parameters (ResNet-152 shapes)
# ----------------------------------------------------------------------------
def _conv_weight(key, kh, kw, cin, cout):
    # kaiming_uniform(nonlinearity='relu'): bound = sqrt(6 / fan_in)
    bound = math.sqrt(6.0 / (kh * kw * cin))
    return jax.random.uniform(key, (kh, kw, cin, cout), jnp.float32, -bound, bound)


def _bn_init(key, c):
    k1, k2, k3, k4 = jax.random.split(key, 4)
    return {
        'gamma': jax.random.uniform(k1, (c,), jnp.float32, 0.5, 1.5),
        'beta': 0.1 * jax.random.normal(k2, (c,), jnp.float32),
        'mean': 0.1 * jax.random.normal(k3, (c,), jnp.float32),
        'var': jax.random.uniform(k4, (c,), jnp.float32, 0.5, 1.5),
    }


def init_params(key, num_classes):
    keys = iter(list(jax.random.split(key, 512)))
    nk = lambda: next(keys)
    params = {
        'conv1': _conv_weight(nk(), 7, 7, 3, 64),
        'bn1': _bn_init(nk(), 64),
    }
    cin = 64
    stages = []
    for planes, nblocks, stride in STAGE_CFG:
        blocks = []
        for b in range(nblocks):
            s = stride if b == 0 else 1
            blk = {
                'stride': s,
                'conv1': _conv_weight(nk(), 1, 1, cin, planes),
                'bn1': _bn_init(nk(), planes),
                'conv2': _conv_weight(nk(), 3, 3, planes, planes),
                'bn2': _bn_init(nk(), planes),
                'conv3': _conv_weight(nk(), 1, 1, planes, planes * EXPANSION),
                'bn3': _bn_init(nk(), planes * EXPANSION),
            }
            if s != 1 or cin != planes * EXPANSION:
                blk['down_conv'] = _conv_weight(nk(), 1, 1, cin, planes * EXPANSION)
                blk['down_bn'] = _bn_init(nk(), planes * EXPANSION)
            blocks.append(blk)
            cin = planes * EXPANSION
        stages.append(blocks)
    params['stages'] = stages
    # classifier replaced by change_last_layer: xavier_uniform weight, zero bias
    bound = math.sqrt(6.0 / (cin + num_classes))
    params['fc_w'] = jax.random.uniform(nk(), (cin, num_classes), jnp.float32,
                                        -bound, bound)
    params['fc_b'] = jnp.zeros((num_classes,), jnp.float32)
    return params


# ----------------------------------------------------------------------------
# Forward pass (matches torchvision resnet152 semantics, inference mode)
# ----------------------------------------------------------------------------
def resnet152_forward(params, x_nchw):
    # layout: NCHW (PyTorch) in, NHWC internally, (N, num_classes) out.
    x = jnp.transpose(x_nchw, (0, 2, 3, 1)).astype(jnp.float32)

    # stem: conv1 7x7/2 + bn1 + relu fused, then maxpool
    x = conv_bn_act(x, params['conv1'], params['bn1'], stride=2, pad=3, relu=True)
    x = maxpool_3x3_s2_p1(x)

    for stage in params['stages']:
        for blk in stage:                                  # Bottleneck
            s = blk['stride']
            if 'down_conv' in blk:
                identity = conv_bn_act(x, blk['down_conv'], blk['down_bn'],
                                       stride=s, pad=0, relu=False)
            else:
                identity = x
            y = conv_bn_act(x, blk['conv1'], blk['bn1'], stride=1, pad=0, relu=True)
            y = conv_bn_act(y, blk['conv2'], blk['bn2'], stride=s, pad=1, relu=True)
            # conv3 + bn3 + skip-add + relu fused in one kernel epilogue
            x = conv_bn_act(y, blk['conv3'], blk['bn3'], stride=1, pad=0,
                            relu=True, residual=identity)

    x = global_avg_pool(x)                                 # adaptive_avg_pool2d((1,1)) + flatten
    logits = linear(x, params['fc_w'], params['fc_b'])     # fc (replaced last layer)
    return logits


if __name__ == "__main__":
    num_classes = 10
    key = jax.random.PRNGKey(0)
    pkey, xkey = jax.random.split(key)
    params = init_params(pkey, num_classes)
    x = jax.random.normal(xkey, (2, 3, 64, 64), jnp.float32)  # NCHW like PyTorch
    out = resnet152_forward(params, x)
    out = jax.block_until_ready(out)
    assert out.shape == (2, num_classes)
    assert bool(jnp.all(jnp.isfinite(out)))
    print("KERNEL_OK")
</pallas_src>

<mosaic_0001>
module attributes {stable_mosaic.version = 11 : i64} {
  func.func @kernel(%arg0: i32, %arg1: i32, %arg2: i32, %arg3: memref<512x256xbf16, #tpu.memory_space<vmem>>, %arg4: memref<256x128xbf16, #tpu.memory_space<vmem>>, %arg5: memref<1x128xf32, #tpu.memory_space<vmem>>, %arg6: memref<1x128xf32, #tpu.memory_space<vmem>>, %arg7: memref<512x128xbf16, #tpu.memory_space<vmem>>, %arg8: memref<512x128xf32, #tpu.memory_space<vmem>>) attributes {dimension_semantics = [#tpu.dimension_semantics<parallel>, #tpu.dimension_semantics<parallel>, #tpu.dimension_semantics<arbitrary>], iteration_bounds = array<i64: 4, 1, 1>, scalar_prefetch = 0 : i64, scratch_operands = 1 : i64, tpu.core_type = #tpu.core_type<tc>, window_params = [{transform_indices = @transform_0, window_bounds = array<i64: 512, 256>}, {transform_indices = @transform_1, window_bounds = array<i64: 256, 128>}, {transform_indices = @transform_2, window_bounds = array<i64: 1, 128>}, {transform_indices = @transform_3, window_bounds = array<i64: 1, 128>}, {transform_indices = @transform_4, window_bounds = array<i64: 512, 128>}]} {
    %c0_i32 = arith.constant 0 : i32
    %0 = arith.cmpi eq, %arg2, %c0_i32 : i32
    %1 = arith.extui %0 : i1 to i32
    %c0_i32_0 = arith.constant 0 : i32
    %2 = arith.cmpi ne, %1, %c0_i32_0 : i32
    scf.if %2 {
      %cst_10 = arith.constant 0.000000e+00 : f32
      %12 = vector.broadcast %cst_10 : f32 to vector<512x128xf32>
      %c0_11 = arith.constant 0 : index
      %c0_12 = arith.constant 0 : index
      %13 = vector.load %arg8[%c0_11, %c0_12] : memref<512x128xf32, #tpu.memory_space<vmem>>, vector<512x128xf32>
      tpu.vector_store %arg8[%c0_11, %c0_12], %12 {strides = array<i32>} : memref<512x128xf32, #tpu.memory_space<vmem>>, vector<512x128xf32>,
    } else {
    }
    %c0 = arith.constant 0 : index
    %c0_1 = arith.constant 0 : index
    %3 = vector.load %arg8[%c0, %c0_1] : memref<512x128xf32, #tpu.memory_space<vmem>>, vector<512x128xf32>
    %c0_2 = arith.constant 0 : index
    %c0_3 = arith.constant 0 : index
    %4 = vector.load %arg3[%c0_2, %c0_3] : memref<512x256xbf16, #tpu.memory_space<vmem>>, vector<512x256xbf16>
    %c0_4 = arith.constant 0 : index
    %c0_5 = arith.constant 0 : index
    %5 = vector.load %arg4[%c0_4, %c0_5] : memref<256x128xbf16, #tpu.memory_space<vmem>>, vector<256x128xbf16>
    %cst = arith.constant dense<0.000000e+00> : vector<512x128xf32>
    %6 = tpu.matmul %4, %5, %cst {dimension_numbers = #tpu.dot_dimension_numbers<[1], [0], [0], [1], [0, 0, 1, 1], [], []>} : vector<512x256xbf16>, vector<256x128xbf16>, vector<512x128xf32> -> vector<512x128xf32>
    %7 = arith.addf %3, %6 : vector<512x128xf32>
    %c0_6 = arith.constant 0 : index
    %c0_7 = arith.constant 0 : index
    %8 = vector.load %arg8[%c0_6, %c0_7] : memref<512x128xf32, #tpu.memory_space<vmem>>, vector<512x128xf32>
    tpu.vector_store %arg8[%c0_6, %c0_7], %7 {strides = array<i32>} : memref<512x128xf32, #tpu.memory_space<vmem>>, vector<512x128xf32>,
    %c0_i32_8 = arith.constant 0 : i32
    %9 = arith.cmpi eq, %arg2, %c0_i32_8 : i32
    %10 = arith.extui %9 : i1 to i32
    %c0_i32_9 = arith.constant 0 : i32
    %11 = arith.cmpi ne, %10, %c0_i32_9 : i32
    scf.if %11 {
      %c0_10 = arith.constant 0 : index
      %c0_11 = arith.constant 0 : index
      %12 = vector.load %arg8[%c0_10, %c0_11] : memref<512x128xf32, #tpu.memory_space<vmem>>, vector<512x128xf32>
      %c0_12 = arith.constant 0 : index
      %c0_13 = arith.constant 0 : index
      %13 = vector.load %arg5[%c0_12, %c0_13] : memref<1x128xf32, #tpu.memory_space<vmem>>, vector<1x128xf32>
      %14 = vector.broadcast %13 : vector<1x128xf32> to vector<512x128xf32>
      %15 = arith.mulf %12, %14 : vector<512x128xf32>
      %c0_14 = arith.constant 0 : index
      %c0_15 = arith.constant 0 : index
      %16 = vector.load %arg6[%c0_14, %c0_15] : memref<1x128xf32, #tpu.memory_space<vmem>>, vector<1x128xf32>
      %17 = vector.broadcast %16 : vector<1x128xf32> to vector<512x128xf32>
      %18 = arith.addf %15, %17 : vector<512x128xf32>
      %cst_16 = arith.constant 0.000000e+00 : f32
      %19 = vector.broadcast %cst_16 : f32 to vector<512x128xf32>
      %20 = arith.maximumf %18, %19 : vector<512x128xf32>
      %21 = arith.truncf %20 : vector<512x128xf32> to vector<512x128xbf16>
      %c0_17 = arith.constant 0 : index
      %c0_18 = arith.constant 0 : index
      %22 = vector.load %arg7[%c0_17, %c0_18] : memref<512x128xbf16, #tpu.memory_space<vmem>>, vector<512x128xbf16>
      tpu.vector_store %arg7[%c0_17, %c0_18], %21 {strides = array<i32>} : memref<512x128xbf16, #tpu.memory_space<vmem>>, vector<512x128xbf16>,
    } else {
    }
    return
  }
  func.func @transform_0(%arg0: i32, %arg1: i32, %arg2: i32) -> (i32, i32) {
    %c0_i32 = arith.constant 0 : i32
    return %arg0, %arg2 : i32, i32
  }
  func.func @transform_1(%arg0: i32, %arg1: i32, %arg2: i32) -> (i32, i32) {
    %c0_i32 = arith.constant 0 : i32
    return %arg2, %arg1 : i32, i32
  }
  func.func @transform_2(%arg0: i32, %arg1: i32, %arg2: i32) -> (i32, i32) {
    %c0_i32 = arith.constant 0 : i32
    %c0_i32_0 = arith.constant 0 : i32
    return %c0_i32, %arg1 : i32, i32
  }
  func.func @transform_3(%arg0: i32, %arg1: i32, %arg2: i32) -> (i32, i32) {
    %c0_i32 = arith.constant 0 : i32
    %c0_i32_0 = arith.constant 0 : i32
    return %c0_i32, %arg1 : i32, i32
  }
  func.func @transform_4(%arg0: i32, %arg1: i32, %arg2: i32) -> (i32, i32) {
    %c0_i32 = arith.constant 0 : i32
    return %arg0, %arg1 : i32, i32
  }
}

</mosaic_0001>

<llo_original>
// kernel: run.1
$region0: #{run.1}
  #allocation0 [shape = 'u32[]', space=smem, size = 0x4, offset = 0x4, fixed_abs, tag = 'smem constant byte address 0x4 - core index']
  #allocation1 [shape = 'u32[144,128]{1,0:T(1,128)}', space=vmem, size = 0x12000, scoped, tag = 'internal scratch']
  #allocation2 [shape = 'f32[512,128]{1,0:T(8,128)}', space=vmem, size = 0x40000, scoped, tag = 'scratch operand']
  %s0 = inlined_call_operand.vmem [shape: bf16[2048,256], index: 0, kind: input, shape index: {}]
  %s1 = inlined_call_operand.vmem [shape: bf16[256,128], index: 1, kind: input, shape index: {}]
  %s2 = inlined_call_operand.vmem [shape: f32[1,128], index: 2, kind: input, shape index: {}]
  %s3 = inlined_call_operand.vmem [shape: f32[1,128], index: 3, kind: input, shape index: {}]
  %s4 = inlined_call_operand.hbm [shape: bf16[2048,128], index: 4, kind: output, shape index: {}]
  %s5 = sld [smem:[#allocation0]]
  $region57: #{run.1} parent=0
    _
  %s7 = ssub.s32 1, %s5
  %s8 = scalar_select 0, %s7, %s5
  $region1: #{run.1} parent=0
    #allocation3 [shape = 'u8[262144]{0}', space=vmem, size = 0x40000, scoped, tag = 'output window, operand 0']
    #allocation4 [shape = 's32[2]{0}', space=sflag, size = 0x8, scoped, tag = 'scoped memory for run.1']
    %9 = vsyncpa [#allocation4], 0
    %s10 = scalar_lea.sflag [#allocation4], 1
    %11 = vsyncpa %s10, 0
    loop: start=0, step=1, limit=6
    $region2: #{run.1} parent=1 // loop_pre_header
      _
    $region3: #{run.1} parent=1 // loop_header
      %s13 = sphi 0, %s17
      %p14 = scmp.ge.s32.totalorder %s13, 6
      %s20 = sphi 0, %s39
      %s21 = sphi 0, %s35
      %s22 = sphi 0, %s31
      %s23 = sphi 0, %s20
      %s24 = sphi 0, %s21
      %s25 = sphi 0, %s22
      %s26 = sphi 0, %s23
      %s27 = sphi 0, %s24
      %s28 = sphi 0, %s25
      %s44 = sphi 0, %s46
      %s47 = sphi 0, %s44
      %s48 = sphi 0, %s47
      %s64 = sphi 0, %s48
      %s72 = sphi 0, %s74
      %s75 = sphi 0, %s72
      %s76 = sphi 0, %s75
      %s92 = sphi 0, %s76
      %s98 = sphi 0, %s100
      %s101 = sphi 0, %s98
      %s102 = sphi 0, %s101
      %s118 = sphi 0, %s102
      %s124 = sphi 0, %s126
      %s127 = sphi 0, %s124
      %s128 = sphi 0, %s127
      %s144 = sphi 0, %s128
      %s152 = sphi 0, %s154
      %s155 = sphi 0, %s152
      %s156 = sphi 0, %s155
      %s172 = sphi 0, %s156
    $region4: #{run.1} parent=1 // loop_header_branch
      %16 = sbr.rel (%p14) target = $region8
    $region5: #{run.1} parent=1 // loop_body
      %s18 = ssub.s32 %s13, 1
      %s19 = ssub.s32 %s13, 2
      %s29 = sadd.s32 1, %s22
      %p30 = scmp.ge.s32.totalorder %s29, 1
      %s31 = scalar_select %p30, 0, %s29
      %s32 = sadd.s32 1, %s21
      %s33 = scalar_select %p30, %s32, %s21
      %p34 = scmp.ge.s32.totalorder %s33, 1
      %s35 = scalar_select %p34, 0, %s33
      %s36 = sadd.s32 1, %s20
      %s37 = scalar_select %p34, %s36, %s20
      %p38 = scmp.ge.s32.totalorder %s37, 4
      %s39 = scalar_select %p38, 0, %s37
      %s40 = ssub.s32 %s20, %s39
      %s41 = ssub.s32 %s22, %s31
      %s42 = sor.u32 %s40, %s41
      %p43 = scmp.eq.s32.totalorder %s42, 0
      %s45 = sadd.s32 %s44, 1
      %s46 = scalar_select %p43, %s44, %s45
      %p49 = pneg %p43
      %p50 = scmp.eq.s32.totalorder %s13, 3
      %p51 = por %p49, %p50
      %p52 = scmp.ne.s32.totalorder %s44, %s47
      %p53 = scmp.eq.s32.totalorder %s13, 0
      %p54 = por %p52, %p53
      %p55 = scmp.ne.s32.totalorder %s44, %s47
      %p56 = scmp.eq.s32.totalorder %s18, 3
      %p57 = por %p55, %p56
      %p58 = scmp.ne.s32.totalorder %s47, %s48
      %p59 = scmp.eq.s32.totalorder %s18, 0
      %p60 = por %p58, %p59
      %p61 = scmp.ne.s32.totalorder %s47, %s48
      %p62 = scmp.eq.s32.totalorder %s19, 3
      %p63 = por %p61, %p62
      %p65 = scmp.ne.s32.totalorder %s48, %s64
      %p66 = scmp.eq.s32.totalorder %s19, 0
      %p67 = por %p65, %p66
      %s68 = ssub.s32 %s22, %s31
      %s69 = ssub.s32 %s21, %s35
      %s70 = sor.u32 %s68, %s69
      %p71 = scmp.eq.s32.totalorder %s70, 0
      %s73 = sadd.s32 %s72, 1
      %s74 = scalar_select %p71, %s72, %s73
      %p77 = pneg %p71
      %p78 = scmp.eq.s32.totalorder %s13, 3
      %p79 = por %p77, %p78
      %p80 = scmp.ne.s32.totalorder %s72, %s75
      %p81 = scmp.eq.s32.totalorder %s13, 0
      %p82 = por %p80, %p81
      %p83 = scmp.ne.s32.totalorder %s72, %s75
      %p84 = scmp.eq.s32.totalorder %s18, 3
      %p85 = por %p83, %p84
      %p86 = scmp.ne.s32.totalorder %s75, %s76
      %p87 = scmp.eq.s32.totalorder %s18, 0
      %p88 = por %p86, %p87
      %p89 = scmp.ne.s32.totalorder %s75, %s76
      %p90 = scmp.eq.s32.totalorder %s19, 3
      %p91 = por %p89, %p90
      %p93 = scmp.ne.s32.totalorder %s76, %s92
      %p94 = scmp.eq.s32.totalorder %s19, 0
      %p95 = por %p93, %p94
      %s96 = ssub.s32 %s21, %s35
      %p97 = scmp.eq.s32.totalorder %s96, 0
      %s99 = sadd.s32 %s98, 1
      %s100 = scalar_select %p97, %s98, %s99
      %p103 = pneg %p97
      %p104 = scmp.eq.s32.totalorder %s13, 3
      %p105 = por %p103, %p104
      %p106 = scmp.ne.s32.totalorder %s98, %s101
      %p107 = scmp.eq.s32.totalorder %s13, 0
      %p108 = por %p106, %p107
      %p109 = scmp.ne.s32.totalorder %s98, %s101
      %p110 = scmp.eq.s32.totalorder %s18, 3
      %p111 = por %p109, %p110
      %p112 = scmp.ne.s32.totalorder %s101, %s102
      %p113 = scmp.eq.s32.totalorder %s18, 0
      %p114 = por %p112, %p113
      %p115 = scmp.ne.s32.totalorder %s101, %s102
      %p116 = scmp.eq.s32.totalorder %s19, 3
      %p117 = por %p115, %p116
      %p119 = scmp.ne.s32.totalorder %s102, %s118
      %p120 = scmp.eq.s32.totalorder %s19, 0
      %p121 = por %p119, %p120
      %s122 = ssub.s32 %s21, %s35
      %p123 = scmp.eq.s32.totalorder %s122, 0
      %s125 = sadd.s32 %s124, 1
      %s126 = scalar_select %p123, %s124, %s125
      %p129 = pneg %p123
      %p130 = scmp.eq.s32.totalorder %s13, 3
      %p131 = por %p129, %p130
      %p132 = scmp.ne.s32.totalorder %s124, %s127
      %p133 = scmp.eq.s32.totalorder %s13, 0
      %p134 = por %p132, %p133
      %p135 = scmp.ne.s32.totalorder %s124, %s127
      %p136 = scmp.eq.s32.totalorder %s18, 3
      %p137 = por %p135, %p136
      %p138 = scmp.ne.s32.totalorder %s127, %s128
      %p139 = scmp.eq.s32.totalorder %s18, 0
      %p140 = por %p138, %p139
      %p141 = scmp.ne.s32.totalorder %s127, %s128
      %p142 = scmp.eq.s32.totalorder %s19, 3
      %p143 = por %p141, %p142
      %p145 = scmp.ne.s32.totalorder %s128, %s144
      %p146 = scmp.eq.s32.totalorder %s19, 0
      %p147 = por %p145, %p146
      %s148 = ssub.s32 %s20, %s39
      %s149 = ssub.s32 %s21, %s35
      %s150 = sor.u32 %s148, %s149
      %p151 = scmp.eq.s32.totalorder %s150, 0
      %s153 = sadd.s32 %s152, 1
      %s154 = scalar_select %p151, %s152, %s153
      %p157 = pneg %p151
      %p158 = scmp.eq.s32.totalorder %s13, 3
      %p159 = por %p157, %p158
      %p160 = scmp.ne.s32.totalorder %s152, %s155
      %p161 = scmp.eq.s32.totalorder %s13, 0
      %p162 = por %p160, %p161
      %p163 = scmp.ne.s32.totalorder %s152, %s155
      %p164 = scmp.eq.s32.totalorder %s18, 3
      %p165 = por %p163, %p164
      %p166 = scmp.ne.s32.totalorder %s155, %s156
      %p167 = scmp.eq.s32.totalorder %s18, 0
      %p168 = por %p166, %p167
      %p169 = scmp.ne.s32.totalorder %s155, %s156
      %p170 = scmp.eq.s32.totalorder %s19, 3
      %p171 = por %p169, %p170
      %p173 = scmp.ne.s32.totalorder %s156, %s172
      %p174 = scmp.eq.s32.totalorder %s19, 0
      %p175 = por %p173, %p174
      %p176 = scmp.le.s32.totalorder 1, %s13
      %p177 = scmp.lt.s32.totalorder %s13, 5
      %p178 = pnand %p176, %p177
      %p179 = pneg %p178
      // Predicated region
      $region9: #{run.1} parent=5 // pred_check
        _
      $region10: #{run.1} parent=5 // pred_check_branch
        %181 = sbr.rel (%p178) target = $region12
      $region11: #{run.1} parent=5 // pred_region
        %s182 = ssub.s32 %s13, 1
        // Predicated region
        $region13: #{run.1} parent=11 // pred_check
          %p183 = pneg %p88
        $region14: #{run.1} parent=11 // pred_check_branch
          %185 = sbr.rel (%p183) target = $region16
        $region15: #{run.1} parent=11 // pred_region
          %s186 = smul.u32 32, %s25
          %p187 = scmp.lt.s32.totalorder %s186, 31
          %s188 = scalar_select %p187, %s186, 31
          %p189 = scmp.lt.s32.totalorder %s24, 0
          %s190 = scalar_select %p189, %s24, 0
          %s191 = sadd.s32 %s190, %s188
          %s192 = smul.addr %s191, 4
          %s193 = scalar_lea.vmem %s1, %s192
          %s194 = smul.u32 32, %s25
        $region16: #{run.1} parent=11 // pred_fallthru
          _
        // Predicated region
        $region17: #{run.1} parent=11 // pred_check
          %p195 = pneg %p114
        $region18: #{run.1} parent=11 // pred_check_branch
          %197 = sbr.rel (%p195) target = $region20
        $region19: #{run.1} parent=11 // pred_region
          %p198 = scmp.lt.s32.totalorder %s24, 0
          %s199 = scalar_select %p198, %s24, 0
          %s200 = scalar_lea.vmem %s2, %s199
        $region20: #{run.1} parent=11 // pred_fallthru
          _
        // Predicated region
        $region21: #{run.1} parent=11 // pred_check
          %p201 = pneg %p140
        $region22: #{run.1} parent=11 // pred_check_branch
          %203 = sbr.rel (%p201) target = $region24
        $region23: #{run.1} parent=11 // pred_region
          %p204 = scmp.lt.s32.totalorder %s24, 0
          %s205 = scalar_select %p204, %s24, 0
          %s206 = scalar_lea.vmem %s3, %s205
        $region24: #{run.1} parent=11 // pred_fallthru
          _
      $region12: #{run.1} parent=5 // pred_fallthru
        _
      %p207 = scmp.lt.s32.totalorder %s13, 4
      // Predicated region
      $region25: #{run.1} parent=5 // pred_check
        %p208 = pneg %p207
      $region26: #{run.1} parent=5 // pred_check_branch
        %210 = sbr.rel (%p208) target = $region28
      $region27: #{run.1} parent=5 // pred_region
        // Predicated region
        $region29: #{run.1} parent=27 // pred_check
          %p211 = pneg %p54
        $region30: #{run.1} parent=27 // pred_check_branch
          %213 = sbr.rel (%p211) target = $region32
        $region31: #{run.1} parent=27 // pred_region
          %s214 = smul.u32 64, %s20
          %s215 = smul.u32 2, %s22
          %p216 = scmp.lt.s32.totalorder %s214, 255
          %s217 = scalar_select %p216, %s214, 255
          %p218 = scmp.lt.s32.totalorder %s215, 1
          %s219 = scalar_select %p218, %s215, 1
          %s220 = smul.addr %s217, 2
          %s221 = sadd.s32 %s219, %s220
          %s222 = smul.addr %s221, 4
          %s223 = scalar_lea.vmem %s0, %s222
          %s224 = smul.u32 64, %s20
          %s225 = smul.u32 2, %s22
        $region32: #{run.1} parent=27 // pred_fallthru
          _
      $region28: #{run.1} parent=5 // pred_fallthru
        _
      %p226 = scmp.le.s32.totalorder 1, %s13
      %p227 = scmp.lt.s32.totalorder %s13, 5
      %p228 = pnand %p226, %p227
      %p229 = pneg %p228
      // Predicated region
      $region33: #{run.1} parent=5 // pred_check
        _
      $region34: #{run.1} parent=5 // pred_check_branch
        %231 = sbr.rel (%p228) target = $region36
      $region35: #{run.1} parent=5 // pred_region
        %s232 = ssub.s32 %s13, 1
        %s233 = smul.u32 64, %s23
        %s234 = smul.u32 2, %s25
        %p235 = scmp.lt.s32.totalorder %s233, 255
        %s236 = scalar_select %p235, %s233, 255
        %p237 = scmp.lt.s32.totalorder %s234, 1
        %s238 = scalar_select %p237, %s234, 1
        %s239 = smul.addr %s236, 2
        %s240 = sadd.s32 %s238, %s239
        %s241 = smul.addr %s240, 4
        %s242 = scalar_lea.vmem %s0, %s241
        %p243 = pneg %p60
        %p244 = pneg %p57
        %s245 = smul.u32 32, %s25
        %p246 = scmp.lt.s32.totalorder %s245, 31
        %s247 = scalar_select %p246, %s245, 31
        %p248 = scmp.lt.s32.totalorder %s24, 0
        %s249 = scalar_select %p248, %s24, 0
        %s250 = sadd.s32 %s249, %s247
        %s251 = smul.addr %s250, 4
        %s252 = scalar_lea.vmem %s1, %s251
        %p253 = pneg %p88
        %p254 = pneg %p85
        %p255 = scmp.lt.s32.totalorder %s24, 0
        %s256 = scalar_select %p255, %s24, 0
        %s257 = scalar_lea.vmem %s2, %s256
        %p258 = pneg %p114
        %p259 = pneg %p111
        %p260 = scmp.lt.s32.totalorder %s24, 0
        %s261 = scalar_select %p260, %s24, 0
        %s262 = scalar_lea.vmem %s3, %s261
        %p263 = pneg %p140
        %p264 = pneg %p137
        %p265 = pneg %p168
        %p266 = pneg %p165
        %s267 = sand.u32 %s155, 1
        %s268 = scalar_lea.sflag [#allocation4], %s267
        %s269 = sand.u32 %s155, 1
        %s270 = smul.addr %s269, 256
        %s271 = scalar_lea.vmem [#allocation3], %s270
        %s272 = smul.u32 64, %s23
        %s273 = smul.u32 2, %s25
        %p274 = scmp.lt.s32.totalorder %s272, 255
        %s275 = scalar_select %p274, %s272, 255
        %p276 = scmp.lt.s32.totalorder %s273, 1
        %s277 = scalar_select %p276, %s273, 1
        %s278 = smul.addr %s275, 2
        %s279 = sadd.s32 %s277, %s278
        %s280 = smul.addr %s279, 4
        %s281 = scalar_lea.vmem %s0, %s280
        %s282 = smul.u32 64, %s23
        %s283 = smul.u32 2, %s25
        %s284 = smul.u32 32, %s25
        %p285 = scmp.lt.s32.totalorder %s284, 31
        %s286 = scalar_select %p285, %s284, 31
        %p287 = scmp.lt.s32.totalorder %s24, 0
        %s288 = scalar_select %p287, %s24, 0
        %s289 = sadd.s32 %s288, %s286
        %s290 = smul.addr %s289, 4
        %s291 = scalar_lea.vmem %s1, %s290
        %s292 = smul.u32 32, %s25
        %p293 = scmp.lt.s32.totalorder %s24, 0
        %s294 = scalar_select %p293, %s24, 0
        %s295 = scalar_lea.vmem %s2, %s294
        %p296 = scmp.lt.s32.totalorder %s24, 0
        %s297 = scalar_select %p296, %s24, 0
        %s298 = scalar_lea.vmem %s3, %s297
        %s299 = smul.u32 64, %s23
        %p301 = scmp.eq.s32.totalorder %s25, 0
        // Predicated region
        $region37: #{run.1} parent=35 // pred_check
          %p302 = pneg %p301
        $region38: #{run.1} parent=35 // pred_check_branch
          %304 = sbr.rel (%p302) target = $region40
        $region39: #{run.1} parent=35 // pred_region
          %305 = vst [vmem:[#allocation2] sm:$0xff] 0.0
          %306 = vst [vmem:[#allocation2 + $0x8] sm:$0xff] 0.0
          %307 = vst [vmem:[#allocation2 + $0x10] sm:$0xff] 0.0
          %308 = vst [vmem:[#allocation2 + $0x18] sm:$0xff] 0.0
          %309 = vst [vmem:[#allocation2 + $0x20] sm:$0xff] 0.0
          %310 = vst [vmem:[#allocation2 + $0x28] sm:$0xff] 0.0
          %311 = vst [vmem:[#allocation2 + $0x30] sm:$0xff] 0.0
          %312 = vst [vmem:[#allocation2 + $0x38] sm:$0xff] 0.0
          %313 = vst [vmem:[#allocation2 + $0x40] sm:$0xff] 0.0
          %314 = vst [vmem:[#allocation2 + $0x48] sm:$0xff] 0.0
          %315 = vst [vmem:[#allocation2 + $0x50] sm:$0xff] 0.0
          %316 = vst [vmem:[#allocation2 + $0x58] sm:$0xff] 0.0
          %317 = vst [vmem:[#allocation2 + $0x60] sm:$0xff] 0.0
          %318 = vst [vmem:[#allocation2 + $0x68] sm:$0xff] 0.0
          %319 = vst [vmem:[#allocation2 + $0x70] sm:$0xff] 0.0
          %320 = vst [vmem:[#allocation2 + $0x78] sm:$0xff] 0.0
          %321 = vst [vmem:[#allocation2 + $0x80] sm:$0xff] 0.0
          %322 = vst [vmem:[#allocation2 + $0x88] sm:$0xff] 0.0
          %323 = vst [vmem:[#allocation2 + $0x90] sm:$0xff] 0.0
          %324 = vst [vmem:[#allocation2 + $0x98] sm:$0xff] 0.0
          %325 = vst [vmem:[#allocation2 + $0xa0] sm:$0xff] 0.0
          %326 = vst [vmem:[#allocation2 + $0xa8] sm:$0xff] 0.0
          %327 = vst [vmem:[#allocation2 + $0xb0] sm:$0xff] 0.0
          %328 = vst [vmem:[#allocation2 + $0xb8] sm:$0xff] 0.0
          %329 = vst [vmem:[#allocation2 + $0xc0] sm:$0xff] 0.0
          %330 = vst [vmem:[#allocation2 + $0xc8] sm:$0xff] 0.0
          %331 = vst [vmem:[#allocation2 + $0xd0] sm:$0xff] 0.0
          %332 = vst [vmem:[#allocation2 + $0xd8] sm:$0xff] 0.0
          %333 = vst [vmem:[#allocation2 + $0xe0] sm:$0xff] 0.0
          %334 = vst [vmem:[#allocation2 + $0xe8] sm:$0xff] 0.0
          %335 = vst [vmem:[#allocation2 + $0xf0] sm:$0xff] 0.0
          %336 = vst [vmem:[#allocation2 + $0xf8] sm:$0xff] 0.0
          %337 = vst [vmem:[#allocation2 + $0x100] sm:$0xff] 0.0
          %338 = vst [vmem:[#allocation2 + $0x108] sm:$0xff] 0.0
          %339 = vst [vmem:[#allocation2 + $0x110] sm:$0xff] 0.0
          %340 = vst [vmem:[#allocation2 + $0x118] sm:$0xff] 0.0
          %341 = vst [vmem:[#allocation2 + $0x120] sm:$0xff] 0.0
          %342 = vst [vmem:[#allocation2 + $0x128] sm:$0xff] 0.0
          %343 = vst [vmem:[#allocation2 + $0x130] sm:$0xff] 0.0
          %344 = vst [vmem:[#allocation2 + $0x138] sm:$0xff] 0.0
          %345 = vst [vmem:[#allocation2 + $0x140] sm:$0xff] 0.0
          %346 = vst [vmem:[#allocation2 + $0x148] sm:$0xff] 0.0
          %347 = vst [vmem:[#allocation2 + $0x150] sm:$0xff] 0.0
          %348 = vst [vmem:[#allocation2 + $0x158] sm:$0xff] 0.0
          %349 = vst [vmem:[#allocation2 + $0x160] sm:$0xff] 0.0
          %350 = vst [vmem:[#allocation2 + $0x168] sm:$0xff] 0.0
          %351 = vst [vmem:[#allocation2 + $0x170] sm:$0xff] 0.0
          %352 = vst [vmem:[#allocation2 + $0x178] sm:$0xff] 0.0
          %353 = vst [vmem:[#allocation2 + $0x180] sm:$0xff] 0.0
          %354 = vst [vmem:[#allocation2 + $0x188] sm:$0xff] 0.0
          %355 = vst [vmem:[#allocation2 + $0x190] sm:$0xff] 0.0
          %356 = vst [vmem:[#allocation2 + $0x198] sm:$0xff] 0.0
          %357 = vst [vmem:[#allocation2 + $0x1a0] sm:$0xff] 0.0
          %358 = vst [vmem:[#allocation2 + $0x1a8] sm:$0xff] 0.0
          %359 = vst [vmem:[#allocation2 + $0x1b0] sm:$0xff] 0.0
          %360 = vst [vmem:[#allocation2 + $0x1b8] sm:$0xff] 0.0
          %361 = vst [vmem:[#allocation2 + $0x1c0] sm:$0xff] 0.0
          %362 = vst [vmem:[#allocation2 + $0x1c8] sm:$0xff] 0.0
          %363 = vst [vmem:[#allocation2 + $0x1d0] sm:$0xff] 0.0
          %364 = vst [vmem:[#allocation2 + $0x1d8] sm:$0xff] 0.0
          %365 = vst [vmem:[#allocation2 + $0x1e0] sm:$0xff] 0.0
          %366 = vst [vmem:[#allocation2 + $0x1e8] sm:$0xff] 0.0
          %367 = vst [vmem:[#allocation2 + $0x1f0] sm:$0xff] 0.0
          %368 = vst [vmem:[#allocation2 + $0x1f8] sm:$0xff] 0.0
        $region40: #{run.1} parent=35 // pred_fallthru
          _
        %v369 = vld [vmem:[#allocation2] sm:$0xff]
        %v370 = vld [vmem:[#allocation2 + $0x8] sm:$0xff]
        %v371 = vld [vmem:[#allocation2 + $0x10] sm:$0xff]
        %v372 = vld [vmem:[#allocation2 + $0x18] sm:$0xff]
        %v373 = vld [vmem:[#allocation2 + $0x20] sm:$0xff]
        %v374 = vld [vmem:[#allocation2 + $0x28] sm:$0xff]
        %v375 = vld [vmem:[#allocation2 + $0x30] sm:$0xff]
        %v376 = vld [vmem:[#allocation2 + $0x38] sm:$0xff]
        %v377 = vld [vmem:[#allocation2 + $0x40] sm:$0xff]
        %v378 = vld [vmem:[#allocation2 + $0x48] sm:$0xff]
        %v379 = vld [vmem:[#allocation2 + $0x50] sm:$0xff]
        %v380 = vld [vmem:[#allocation2 + $0x58] sm:$0xff]
        %v381 = vld [vmem:[#allocation2 + $0x60] sm:$0xff]
        %v382 = vld [vmem:[#allocation2 + $0x68] sm:$0xff]
        %v383 = vld [vmem:[#allocation2 + $0x70] sm:$0xff]
        %v384 = vld [vmem:[#allocation2 + $0x78] sm:$0xff]
        %v385 = vld [vmem:[#allocation2 + $0x80] sm:$0xff]
        %v386 = vld [vmem:[#allocation2 + $0x88] sm:$0xff]
        %v387 = vld [vmem:[#allocation2 + $0x90] sm:$0xff]
        %v388 = vld [vmem:[#allocation2 + $0x98] sm:$0xff]
        %v389 = vld [vmem:[#allocation2 + $0xa0] sm:$0xff]
        %v390 = vld [vmem:[#allocation2 + $0xa8] sm:$0xff]
        %v391 = vld [vmem:[#allocation2 + $0xb0] sm:$0xff]
        %v392 = vld [vmem:[#allocation2 + $0xb8] sm:$0xff]
        %v393 = vld [vmem:[#allocation2 + $0xc0] sm:$0xff]
        %v394 = vld [vmem:[#allocation2 + $0xc8] sm:$0xff]
        %v395 = vld [vmem:[#allocation2 + $0xd0] sm:$0xff]
        %v396 = vld [vmem:[#allocation2 + $0xd8] sm:$0xff]
        %v397 = vld [vmem:[#allocation2 + $0xe0] sm:$0xff]
        %v398 = vld [vmem:[#allocation2 + $0xe8] sm:$0xff]
        %v399 = vld [vmem:[#allocation2 + $0xf0] sm:$0xff]
        %v400 = vld [vmem:[#allocation2 + $0xf8] sm:$0xff]
        %v401 = vld [vmem:[#allocation2 + $0x100] sm:$0xff]
        %v402 = vld [vmem:[#allocation2 + $0x108] sm:$0xff]
        %v403 = vld [vmem:[#allocation2 + $0x110] sm:$0xff]
        %v404 = vld [vmem:[#allocation2 + $0x118] sm:$0xff]
        %v405 = vld [vmem:[#allocation2 + $0x120] sm:$0xff]
        %v406 = vld [vmem:[#allocation2 + $0x128] sm:$0xff]
        %v407 = vld [vmem:[#allocation2 + $0x130] sm:$0xff]
        %v408 = vld [vmem:[#allocation2 + $0x138] sm:$0xff]
        %v409 = vld [vmem:[#allocation2 + $0x140] sm:$0xff]
        %v410 = vld [vmem:[#allocation2 + $0x148] sm:$0xff]
        %v411 = vld [vmem:[#allocation2 + $0x150] sm:$0xff]
        %v412 = vld [vmem:[#allocation2 + $0x158] sm:$0xff]
        %v413 = vld [vmem:[#allocation2 + $0x160] sm:$0xff]
        %v414 = vld [vmem:[#allocation2 + $0x168] sm:$0xff]
        %v415 = vld [vmem:[#allocation2 + $0x170] sm:$0xff]
        %v416 = vld [vmem:[#allocation2 + $0x178] sm:$0xff]
        %v417 = vld [vmem:[#allocation2 + $0x180] sm:$0xff]
        %v418 = vld [vmem:[#allocation2 + $0x188] sm:$0xff]
        %v419 = vld [vmem:[#allocation2 + $0x190] sm:$0xff]
        %v420 = vld [vmem:[#allocation2 + $0x198] sm:$0xff]
        %v421 = vld [vmem:[#allocation2 + $0x1a0] sm:$0xff]
        %v422 = vld [vmem:[#allocation2 + $0x1a8] sm:$0xff]
        %v423 = vld [vmem:[#allocation2 + $0x1b0] sm:$0xff]
        %v424 = vld [vmem:[#allocation2 + $0x1b8] sm:$0xff]
        %v425 = vld [vmem:[#allocation2 + $0x1c0] sm:$0xff]
        %v426 = vld [vmem:[#allocation2 + $0x1c8] sm:$0xff]
        %v427 = vld [vmem:[#allocation2 + $0x1d0] sm:$0xff]
        %v428 = vld [vmem:[#allocation2 + $0x1d8] sm:$0xff]
        %v429 = vld [vmem:[#allocation2 + $0x1e0] sm:$0xff]
        %v430 = vld [vmem:[#allocation2 + $0x1e8] sm:$0xff]
        %v431 = vld [vmem:[#allocation2 + $0x1f0] sm:$0xff]
        %v432 = vld [vmem:[#allocation2 + $0x1f8] sm:$0xff]
        %v433 = vld [vmem:[%s281] sm:$0xff]
        %v434 = vld [vmem:[%s281 + $0x8] sm:$0xff]
        %v435 = vld [vmem:[%s281 + $0x10] sm:$0xff]
        %v436 = vld [vmem:[%s281 + $0x18] sm:$0xff]
        %v437 = vld [vmem:[%s281 + $0x20] sm:$0xff]
        %v438 = vld [vmem:[%s281 + $0x28] sm:$0xff]
        %v439 = vld [vmem:[%s281 + $0x30] sm:$0xff]
        %v440 = vld [vmem:[%s281 + $0x38] sm:$0xff]
        %v441 = vld [vmem:[%s281 + $0x40] sm:$0xff]
        %v442 = vld [vmem:[%s281 + $0x48] sm:$0xff]
        %v443 = vld [vmem:[%s281 + $0x50] sm:$0xff]
        %v444 = vld [vmem:[%s281 + $0x58] sm:$0xff]
        %v445 = vld [vmem:[%s281 + $0x60] sm:$0xff]
        %v446 = vld [vmem:[%s281 + $0x68] sm:$0xff]
        %v447 = vld [vmem:[%s281 + $0x70] sm:$0xff]
        %v448 = vld [vmem:[%s281 + $0x78] sm:$0xff]
        %v449 = vld [vmem:[%s281 + $0x80] sm:$0xff]
        %v450 = vld [vmem:[%s281 + $0x88] sm:$0xff]
        %v451 = vld [vmem:[%s281 + $0x90] sm:$0xff]
        %v452 = vld [vmem:[%s281 + $0x98] sm:$0xff]
        %v453 = vld [vmem:[%s281 + $0xa0] sm:$0xff]
        %v454 = vld [vmem:[%s281 + $0xa8] sm:$0xff]
        %v455 = vld [vmem:[%s281 + $0xb0] sm:$0xff]
        %v456 = vld [vmem:[%s281 + $0xb8] sm:$0xff]
        %v457 = vld [vmem:[%s281 + $0xc0] sm:$0xff]
        %v458 = vld [vmem:[%s281 + $0xc8] sm:$0xff]
        %v459 = vld [vmem:[%s281 + $0xd0] sm:$0xff]
        %v460 = vld [vmem:[%s281 + $0xd8] sm:$0xff]
        %v461 = vld [vmem:[%s281 + $0xe0] sm:$0xff]
        %v462 = vld [vmem:[%s281 + $0xe8] sm:$0xff]
        %v463 = vld [vmem:[%s281 + $0xf0] sm:$0xff]
        %v464 = vld [vmem:[%s281 + $0xf8] sm:$0xff]
        %v465 = vld [vmem:[%s281 + $0x100] sm:$0xff]
        %v466 = vld [vmem:[%s281 + $0x108] sm:$0xff]
        %v467 = vld [vmem:[%s281 + $0x110] sm:$0xff]
        %v468 = vld [vmem:[%s281 + $0x118] sm:$0xff]
        %v469 = vld [vmem:[%s281 + $0x120] sm:$0xff]
        %v470 = vld [vmem:[%s281 + $0x128] sm:$0xff]
        %v471 = vld [vmem:[%s281 + $0x130] sm:$0xff]
        %v472 = vld [vmem:[%s281 + $0x138] sm:$0xff]
        %v473 = vld [vmem:[%s281 + $0x140] sm:$0xff]
        %v474 = vld [vmem:[%s281 + $0x148] sm:$0xff]
        %v475 = vld [vmem:[%s281 + $0x150] sm:$0xff]
        %v476 = vld [vmem:[%s281 + $0x158] sm:$0xff]
        %v477 = vld [vmem:[%s281 + $0x160] sm:$0xff]
        %v478 = vld [vmem:[%s281 + $0x168] sm:$0xff]
        %v479 = vld [vmem:[%s281 + $0x170] sm:$0xff]
        %v480 = vld [vmem:[%s281 + $0x178] sm:$0xff]
        %v481 = vld [vmem:[%s281 + $0x180] sm:$0xff]
        %v482 = vld [vmem:[%s281 + $0x188] sm:$0xff]
        %v483 = vld [vmem:[%s281 + $0x190] sm:$0xff]
        %v484 = vld [vmem:[%s281 + $0x198] sm:$0xff]
        %v485 = vld [vmem:[%s281 + $0x1a0] sm:$0xff]
        %v486 = vld [vmem:[%s281 + $0x1a8] sm:$0xff]
        %v487 = vld [vmem:[%s281 + $0x1b0] sm:$0xff]
        %v488 = vld [vmem:[%s281 + $0x1b8] sm:$0xff]
        %v489 = vld [vmem:[%s281 + $0x1c0] sm:$0xff]
        %v490 = vld [vmem:[%s281 + $0x1c8] sm:$0xff]
        %v491 = vld [vmem:[%s281 + $0x1d0] sm:$0xff]
        %v492 = vld [vmem:[%s281 + $0x1d8] sm:$0xff]
        %v493 = vld [vmem:[%s281 + $0x1e0] sm:$0xff]
        %v494 = vld [vmem:[%s281 + $0x1e8] sm:$0xff]
        %v495 = vld [vmem:[%s281 + $0x1f0] sm:$0xff]
        %v496 = vld [vmem:[%s281 + $0x1f8] sm:$0xff]
        %v497 = vld [vmem:[%s291] sm:$0xf]
        %v498 = vld [vmem:[%s291 + $0x4] sm:$0xf]
        %v499 = vld [vmem:[%s291 + $0x8] sm:$0xf]
        %v500 = vld [vmem:[%s291 + $0xc] sm:$0xf]
        %v501 = vld [vmem:[%s291 + $0x10] sm:$0xf]
        %v502 = vld [vmem:[%s291 + $0x14] sm:$0xf]
        %v503 = vld [vmem:[%s291 + $0x18] sm:$0xf]
        %v504 = vld [vmem:[%s291 + $0x1c] sm:$0xf]
        %v505 = vld [vmem:[%s291 + $0x20] sm:$0xf]
        %v506 = vld [vmem:[%s291 + $0x24] sm:$0xf]
        %v507 = vld [vmem:[%s291 + $0x28] sm:$0xf]
        %v508 = vld [vmem:[%s291 + $0x2c] sm:$0xf]
        %v509 = vld [vmem:[%s291 + $0x30] sm:$0xf]
        %v510 = vld [vmem:[%s291 + $0x34] sm:$0xf]
        %v511 = vld [vmem:[%s291 + $0x38] sm:$0xf]
        %v512 = vld [vmem:[%s291 + $0x3c] sm:$0xf]
        %v513 = vld [vmem:[%s291 + $0x40] sm:$0xf]
        %v514 = vld [vmem:[%s291 + $0x44] sm:$0xf]
        %v515 = vld [vmem:[%s291 + $0x48] sm:$0xf]
        %v516 = vld [vmem:[%s291 + $0x4c] sm:$0xf]
        %v517 = vld [vmem:[%s291 + $0x50] sm:$0xf]
        %v518 = vld [vmem:[%s291 + $0x54] sm:$0xf]
        %v519 = vld [vmem:[%s291 + $0x58] sm:$0xf]
        %v520 = vld [vmem:[%s291 + $0x5c] sm:$0xf]
        %v521 = vld [vmem:[%s291 + $0x60] sm:$0xf]
        %v522 = vld [vmem:[%s291 + $0x64] sm:$0xf]
        %v523 = vld [vmem:[%s291 + $0x68] sm:$0xf]
        %v524 = vld [vmem:[%s291 + $0x6c] sm:$0xf]
        %v525 = vld [vmem:[%s291 + $0x70] sm:$0xf]
        %v526 = vld [vmem:[%s291 + $0x74] sm:$0xf]
        %v527 = vld [vmem:[%s291 + $0x78] sm:$0xf]
        %v528 = vld [vmem:[%s291 + $0x7c] sm:$0xf]
        %v593 = vunpack.c.l.b16 %v433
        %v594 = vunpack.c.h.b16 %v433
        %v595 = vunpack.c.l.b16 %v434
        %v596 = vunpack.c.h.b16 %v434
        %v597 = vunpack.c.l.b16 %v435
        %v598 = vunpack.c.h.b16 %v435
        %v599 = vunpack.c.l.b16 %v436
        %v600 = vunpack.c.h.b16 %v436
        %v601 = vunpack.c.l.b16 %v437
        %v602 = vunpack.c.h.b16 %v437
        %v603 = vunpack.c.l.b16 %v438
        %v604 = vunpack.c.h.b16 %v438
        %v605 = vunpack.c.l.b16 %v439
        %v606 = vunpack.c.h.b16 %v439
        %v607 = vunpack.c.l.b16 %v440
        %v608 = vunpack.c.h.b16 %v440
        %v609 = vunpack.c.l.b16 %v441
        %v610 = vunpack.c.h.b16 %v441
        %v611 = vunpack.c.l.b16 %v442
        %v612 = vunpack.c.h.b16 %v442
        %v613 = vunpack.c.l.b16 %v443
        %v614 = vunpack.c.h.b16 %v443
        %v615 = vunpack.c.l.b16 %v444
        %v616 = vunpack.c.h.b16 %v444
        %v617 = vunpack.c.l.b16 %v445
        %v618 = vunpack.c.h.b16 %v445
        %v619 = vunpack.c.l.b16 %v446
        %v620 = vunpack.c.h.b16 %v446
        %v621 = vunpack.c.l.b16 %v447
        %v622 = vunpack.c.h.b16 %v447
        %v623 = vunpack.c.l.b16 %v448
        %v624 = vunpack.c.h.b16 %v448
        %v625 = vunpack.c.l.b16 %v449
        %v626 = vunpack.c.h.b16 %v449
        %v627 = vunpack.c.l.b16 %v450
        %v628 = vunpack.c.h.b16 %v450
        %v629 = vunpack.c.l.b16 %v451
        %v630 = vunpack.c.h.b16 %v451
        %v631 = vunpack.c.l.b16 %v452
        %v632 = vunpack.c.h.b16 %v452
        %v633 = vunpack.c.l.b16 %v453
        %v634 = vunpack.c.h.b16 %v453
        %v635 = vunpack.c.l.b16 %v454
        %v636 = vunpack.c.h.b16 %v454
        %v637 = vunpack.c.l.b16 %v455
        %v638 = vunpack.c.h.b16 %v455
        %v639 = vunpack.c.l.b16 %v456
        %v640 = vunpack.c.h.b16 %v456
        %v641 = vunpack.c.l.b16 %v457
        %v642 = vunpack.c.h.b16 %v457
        %v643 = vunpack.c.l.b16 %v458
        %v644 = vunpack.c.h.b16 %v458
        %v645 = vunpack.c.l.b16 %v459
        %v646 = vunpack.c.h.b16 %v459
        %v647 = vunpack.c.l.b16 %v460
        %v648 = vunpack.c.h.b16 %v460
        %v649 = vunpack.c.l.b16 %v461
        %v650 = vunpack.c.h.b16 %v461
        %v651 = vunpack.c.l.b16 %v462
        %v652 = vunpack.c.h.b16 %v462
        %v653 = vunpack.c.l.b16 %v463
        %v654 = vunpack.c.h.b16 %v463
        %v655 = vunpack.c.l.b16 %v464
        %v656 = vunpack.c.h.b16 %v464
        %v657 = vunpack.c.l.b16 %v465
        %v658 = vunpack.c.h.b16 %v465
        %v659 = vunpack.c.l.b16 %v466
        %v660 = vunpack.c.h.b16 %v466
        %v661 = vunpack.c.l.b16 %v467
        %v662 = vunpack.c.h.b16 %v467
        %v663 = vunpack.c.l.b16 %v468
        %v664 = vunpack.c.h.b16 %v468
        %v665 = vunpack.c.l.b16 %v469
        %v666 = vunpack.c.h.b16 %v469
        %v667 = vunpack.c.l.b16 %v470
        %v668 = vunpack.c.h.b16 %v470
        %v669 = vunpack.c.l.b16 %v471
        %v670 = vunpack.c.h.b16 %v471
        %v671 = vunpack.c.l.b16 %v472
        %v672 = vunpack.c.h.b16 %v472
        %v673 = vunpack.c.l.b16 %v473
        %v674 = vunpack.c.h.b16 %v473
        %v675 = vunpack.c.l.b16 %v474
        %v676 = vunpack.c.h.b16 %v474
        %v677 = vunpack.c.l.b16 %v475
        %v678 = vunpack.c.h.b16 %v475
        %v679 = vunpack.c.l.b16 %v476
        %v680 = vunpack.c.h.b16 %v476
        %v681 = vunpack.c.l.b16 %v477
        %v682 = vunpack.c.h.b16 %v477
        %v683 = vunpack.c.l.b16 %v478
        %v684 = vunpack.c.h.b16 %v478
        %v685 = vunpack.c.l.b16 %v479
        %v686 = vunpack.c.h.b16 %v479
        %v687 = vunpack.c.l.b16 %v480
        %v688 = vunpack.c.h.b16 %v480
        %v689 = vunpack.c.l.b16 %v481
        %v690 = vunpack.c.h.b16 %v481
        %v691 = vunpack.c.l.b16 %v482
        %v692 = vunpack.c.h.b16 %v482
        %v693 = vunpack.c.l.b16 %v483
        %v694 = vunpack.c.h.b16 %v483
        %v695 = vunpack.c.l.b16 %v484
        %v696 = vunpack.c.h.b16 %v484
        %v697 = vunpack.c.l.b16 %v485
        %v698 = vunpack.c.h.b16 %v485
        %v699 = vunpack.c.l.b16 %v486
        %v700 = vunpack.c.h.b16 %v486
        %v701 = vunpack.c.l.b16 %v487
        %v702 = vunpack.c.h.b16 %v487
        %v703 = vunpack.c.l.b16 %v488
        %v704 = vunpack.c.h.b16 %v488
        %v705 = vunpack.c.l.b16 %v489
        %v706 = vunpack.c.h.b16 %v489
        %v707 = vunpack.c.l.b16 %v490
        %v708 = vunpack.c.h.b16 %v490
        %v709 = vunpack.c.l.b16 %v491
        %v710 = vunpack.c.h.b16 %v491
        %v711 = vunpack.c.l.b16 %v492
        %v712 = vunpack.c.h.b16 %v492
        %v713 = vunpack.c.l.b16 %v493
        %v714 = vunpack.c.h.b16 %v493
        %v715 = vunpack.c.l.b16 %v494
        %v716 = vunpack.c.h.b16 %v494
        %v717 = vunpack.c.l.b16 %v495
        %v718 = vunpack.c.h.b16 %v495
        %v719 = vunpack.c.l.b16 %v496
        %v720 = vunpack.c.h.b16 %v496
        %v721 = vpack.c.b16 %v595, %v593
        %v722 = vpack.c.b16 %v596, %v594
        %v723 = vpack.c.b16 %v599, %v597
        %v724 = vpack.c.b16 %v600, %v598
        %v725 = vpack.c.b16 %v603, %v601
        %v726 = vpack.c.b16 %v604, %v602
        %v727 = vpack.c.b16 %v607, %v605
        %v728 = vpack.c.b16 %v608, %v606
        %v729 = vpack.c.b16 %v611, %v609
        %v730 = vpack.c.b16 %v612, %v610
        %v731 = vpack.c.b16 %v615, %v613
        %v732 = vpack.c.b16 %v616, %v614
        %v733 = vpack.c.b16 %v619, %v617
        %v734 = vpack.c.b16 %v620, %v618
        %v735 = vpack.c.b16 %v623, %v621
        %v736 = vpack.c.b16 %v624, %v622
        %v737 = vpack.c.b16 %v627, %v625
        %v738 = vpack.c.b16 %v628, %v626
        %v739 = vpack.c.b16 %v631, %v629
        %v740 = vpack.c.b16 %v632, %v630
        %v741 = vpack.c.b16 %v635, %v633
        %v742 = vpack.c.b16 %v636, %v634
        %v743 = vpack.c.b16 %v639, %v637
        %v744 = vpack.c.b16 %v640, %v638
        %v745 = vpack.c.b16 %v643, %v641
        %v746 = vpack.c.b16 %v644, %v642
        %v747 = vpack.c.b16 %v647, %v645
        %v748 = vpack.c.b16 %v648, %v646
        %v749 = vpack.c.b16 %v651, %v649
        %v750 = vpack.c.b16 %v652, %v650
        %v751 = vpack.c.b16 %v655, %v653
        %v752 = vpack.c.b16 %v656, %v654
        %v753 = vpack.c.b16 %v659, %v657
        %v754 = vpack.c.b16 %v660, %v658
        %v755 = vpack.c.b16 %v663, %v661
        %v756 = vpack.c.b16 %v664, %v662
        %v757 = vpack.c.b16 %v667, %v665
        %v758 = vpack.c.b16 %v668, %v666
        %v759 = vpack.c.b16 %v671, %v669
        %v760 = vpack.c.b16 %v672, %v670
        %v761 = vpack.c.b16 %v675, %v673
        %v762 = vpack.c.b16 %v676, %v674
        %v763 = vpack.c.b16 %v679, %v677
        %v764 = vpack.c.b16 %v680, %v678
        %v765 = vpack.c.b16 %v683, %v681
        %v766 = vpack.c.b16 %v684, %v682
        %v767 = vpack.c.b16 %v687, %v685
        %v768 = vpack.c.b16 %v688, %v686
        %v769 = vpack.c.b16 %v691, %v689
        %v770 = vpack.c.b16 %v692, %v690
        %v771 = vpack.c.b16 %v695, %v693
        %v772 = vpack.c.b16 %v696, %v694
        %v773 = vpack.c.b16 %v699, %v697
        %v774 = vpack.c.b16 %v700, %v698
        %v775 = vpack.c.b16 %v703, %v701
        %v776 = vpack.c.b16 %v704, %v702
        %v777 = vpack.c.b16 %v707, %v705
        %v778 = vpack.c.b16 %v708, %v706
        %v779 = vpack.c.b16 %v711, %v709
        %v780 = vpack.c.b16 %v712, %v710
        %v781 = vpack.c.b16 %v715, %v713
        %v782 = vpack.c.b16 %v716, %v714
        %v783 = vpack.c.b16 %v719, %v717
        %v784 = vpack.c.b16 %v720, %v718
        %v881 = vunpack.c.l.b16 %v497
        %v882 = vunpack.c.l.b16 %v498
        %v883 = vunpack.c.l.b16 %v499
        %v884 = vunpack.c.l.b16 %v500
        %v885 = vunpack.c.l.b16 %v501
        %v886 = vunpack.c.l.b16 %v502
        %v887 = vunpack.c.l.b16 %v503
        %v888 = vunpack.c.l.b16 %v504
        %v889 = vunpack.c.l.b16 %v505
        %v890 = vunpack.c.l.b16 %v506
        %v891 = vunpack.c.l.b16 %v507
        %v892 = vunpack.c.l.b16 %v508
        %v893 = vunpack.c.l.b16 %v509
        %v894 = vunpack.c.l.b16 %v510
        %v895 = vunpack.c.l.b16 %v511
        %v896 = vunpack.c.l.b16 %v512
        %v897 = vunpack.c.l.b16 %v513
        %v898 = vunpack.c.l.b16 %v514
        %v899 = vunpack.c.l.b16 %v515
        %v900 = vunpack.c.l.b16 %v516
        %v901 = vunpack.c.l.b16 %v517
        %v902 = vunpack.c.l.b16 %v518
        %v903 = vunpack.c.l.b16 %v519
        %v904 = vunpack.c.l.b16 %v520
        %v905 = vunpack.c.l.b16 %v521
        %v906 = vunpack.c.l.b16 %v522
        %v907 = vunpack.c.l.b16 %v523
        %v908 = vunpack.c.l.b16 %v524
        %v909 = vunpack.c.l.b16 %v525
        %v910 = vunpack.c.l.b16 %v526
        %v911 = vunpack.c.l.b16 %v527
        %v912 = vunpack.c.l.b16 %v528
        %v913 = vpack.c.b16 %v882, %v881
        %v914 = vpack.c.b16 %v884, %v883
        %v915 = vpack.c.b16 %v886, %v885
        %v916 = vpack.c.b16 %v888, %v887
        %v917 = vpack.c.b16 %v890, %v889
        %v918 = vpack.c.b16 %v892, %v891
        %v919 = vpack.c.b16 %v894, %v893
        %v920 = vpack.c.b16 %v896, %v895
        %v921 = vpack.c.b16 %v898, %v897
        %v922 = vpack.c.b16 %v900, %v899
        %v923 = vpack.c.b16 %v902, %v901
        %v924 = vpack.c.b16 %v904, %v903
        %v925 = vpack.c.b16 %v906, %v905
        %v926 = vpack.c.b16 %v908, %v907
        %v927 = vpack.c.b16 %v910, %v909
        %v928 = vpack.c.b16 %v912, %v911
        %945 = vmatprep.subr.bf16.mxu0 0
        %946 = vmatpush1.bf16.msra.mxu0 %v913
        %947 = vmatprep.subr.bf16.mxu0 0
        %948 = vmatpush1.bf16.msra.mxu0 %v914
        %949 = vmatprep.subr.bf16.mxu0 0
        %950 = vmatpush1.bf16.msra.mxu0 %v915
        %951 = vmatprep.subr.bf16.mxu0 0
        %952 = vmatpush1.bf16.msra.mxu0 %v916
        %953 = vmatprep.subr.bf16.mxu0 0
        %954 = vmatpush1.bf16.msra.mxu0 %v917
        %955 = vmatprep.subr.bf16.mxu0 0
        %956 = vmatpush1.bf16.msra.mxu0 %v918
        %957 = vmatprep.subr.bf16.mxu0 0
        %958 = vmatpush1.bf16.msra.mxu0 %v919
        %959 = vmatprep.subr.bf16.mxu0 0
        %960 = vmatpush1.bf16.msra.mxu0 %v920
        %961 = vmatprep.subr.bf16.mxu0 0
        %962 = vmatpush1.bf16.msra.mxu0 %v921
        %963 = vmatprep.subr.bf16.mxu0 0
        %964 = vmatpush1.bf16.msra.mxu0 %v922
        %965 = vmatprep.subr.bf16.mxu0 0
        %966 = vmatpush1.bf16.msra.mxu0 %v923
        %967 = vmatprep.subr.bf16.mxu0 0
        %968 = vmatpush1.bf16.msra.mxu0 %v924
        %969 = vmatprep.subr.bf16.mxu0 0
        %970 = vmatpush1.bf16.msra.mxu0 %v925
        %971 = vmatprep.subr.bf16.mxu0 0
        %972 = vmatpush1.bf16.msra.mxu0 %v926
        %973 = vmatprep.subr.bf16.mxu0 0
        %974 = vmatpush1.bf16.msra.mxu0 %v927
        %975 = vmatprep.subr.bf16.mxu0 0
        %976 = vmatpush1.bf16.msra.mxu0 %v928
        %977 = vmatprep.mubr.bf16.mxu0 %v722
        %978 = vmatmul.mubr.bf16.gmra.mrb[0].mxu0 %v721
        %v979 = vpop.f32.mrb[0].mxu0
        %v980 = vadd.f32 0.0, %v979
        %v981 = vpop.f32.mrb[0].mxu0
        %v982 = vpop.f32.mrb[0].mxu0
        %v983 = vadd.f32 0.0, %v982
        %v984 = vpop.f32.mrb[0].mxu0
        %985 = vmatprep.mubr.bf16.mxu0 %v724
        %986 = vmatmul.mubr.bf16.gmra.mrb[0].mxu0 %v723
        %v987 = vpop.f32.mrb[0].mxu0
        %v988 = vadd.f32 0.0, %v987
        %v989 = vpop.f32.mrb[0].mxu0
        %v990 = vpop.f32.mrb[0].mxu0
        %v991 = vadd.f32 0.0, %v990
        %v992 = vpop.f32.mrb[0].mxu0
        %993 = vmatprep.mubr.bf16.mxu0 %v726
        %994 = vmatmul.mubr.bf16.gmra.mrb[0].mxu0 %v725
        %v995 = vpop.f32.mrb[0].mxu0
        %v996 = vadd.f32 0.0, %v995
        %v997 = vpop.f32.mrb[0].mxu0
        %v998 = vpop.f32.mrb[0].mxu0
        %v999 = vadd.f32 0.0, %v998
        %v1000 = vpop.f32.mrb[0].mxu0
        %1001 = vmatprep.mubr.bf16.mxu0 %v728
        %1002 = vmatmul.mubr.bf16.gmra.mrb[0].mxu0 %v727
        %v1003 = vpop.f32.mrb[0].mxu0
        %v1004 = vadd.f32 0.0, %v1003
        %v1005 = vpop.f32.mrb[0].mxu0
        %v1006 = vpop.f32.mrb[0].mxu0
        %v1007 = vadd.f32 0.0, %v1006
        %v1008 = vpop.f32.mrb[0].mxu0
        %1009 = vmatprep.mubr.bf16.mxu0 %v730
        %1010 = vmatmul.mubr.bf16.gmra.mrb[0].mxu0 %v729
        %v1011 = vpop.f32.mrb[0].mxu0
        %v1012 = vadd.f32 0.0, %v1011
        %v1013 = vpop.f32.mrb[0].mxu0
        %v1014 = vpop.f32.mrb[0].mxu0
        %v1015 = vadd.f32 0.0, %v1014
        %v1016 = vpop.f32.mrb[0].mxu0
        %1017 = vmatprep.mubr.bf16.mxu0 %v732
        %1018 = vmatmul.mubr.bf16.gmra.mrb[0].mxu0 %v731
        %v1019 = vpop.f32.mrb[0].mxu0
        %v1020 = vadd.f32 0.0, %v1019
        %v1021 = vpop.f32.mrb[0].mxu0
        %v1022 = vpop.f32.mrb[0].mxu0
        %v1023 = vadd.f32 0.0, %v1022
        %v1024 = vpop.f32.mrb[0].mxu0
        %1025 = vmatprep.mubr.bf16.mxu0 %v734
        %1026 = vmatmul.mubr.bf16.gmra.mrb[0].mxu0 %v733
        %v1027 = vpop.f32.mrb[0].mxu0
        %v1028 = vadd.f32 0.0, %v1027
        %v1029 = vpop.f32.mrb[0].mxu0
        %v1030 = vpop.f32.mrb[0].mxu0
        %v1031 = vadd.f32 0.0, %v1030
        %v1032 = vpop.f32.mrb[0].mxu0
        %1033 = vmatprep.mubr.bf16.mxu0 %v736
        %1034 = vmatmul.mubr.bf16.gmra.mrb[0].mxu0 %v735
        %v1035 = vpop.f32.mrb[0].mxu0
        %v1036 = vadd.f32 0.0, %v1035
        %v1037 = vpop.f32.mrb[0].mxu0
        %v1038 = vpop.f32.mrb[0].mxu0
        %v1039 = vadd.f32 0.0, %v1038
        %v1040 = vpop.f32.mrb[0].mxu0
        %1041 = vmatprep.mubr.bf16.mxu0 %v738
        %1042 = vmatmul.mubr.bf16.gmra.mrb[0].mxu0 %v737
        %v1043 = vpop.f32.mrb[0].mxu0
        %v1044 = vadd.f32 0.0, %v1043
        %v1045 = vpop.f32.mrb[0].mxu0
        %v1046 = vpop.f32.mrb[0].mxu0
        %v1047 = vadd.f32 0.0, %v1046
        %v1048 = vpop.f32.mrb[0].mxu0
        %1049 = vmatprep.mubr.bf16.mxu0 %v740
        %1050 = vmatmul.mubr.bf16.gmra.mrb[0].mxu0 %v739
        %v1051 = vpop.f32.mrb[0].mxu0
        %v1052 = vadd.f32 0.0, %v1051
        %v1053 = vpop.f32.mrb[0].mxu0
        %v1054 = vpop.f32.mrb[0].mxu0
        %v1055 = vadd.f32 0.0, %v1054
        %v1056 = vpop.f32.mrb[0].mxu0
        %1057 = vmatprep.mubr.bf16.mxu0 %v742
        %1058 = vmatmul.mubr.bf16.gmra.mrb[0].mxu0 %v741
        %v1059 = vpop.f32.mrb[0].mxu0
        %v1060 = vadd.f32 0.0, %v1059
        %v1061 = vpop.f32.mrb[0].mxu0
        %v1062 = vpop.f32.mrb[0].mxu0
        %v1063 = vadd.f32 0.0, %v1062
        %v1064 = vpop.f32.mrb[0].mxu0
        %1065 = vmatprep.mubr.bf16.mxu0 %v744
        %1066 = vmatmul.mubr.bf16.gmra.mrb[0].mxu0 %v743
        %v1067 = vpop.f32.mrb[0].mxu0
        %v1068 = vadd.f32 0.0, %v1067
        %v1069 = vpop.f32.mrb[0].mxu0
        %v1070 = vpop.f32.mrb[0].mxu0
        %v1071 = vadd.f32 0.0, %v1070
        %v1072 = vpop.f32.mrb[0].mxu0
        %1073 = vmatprep.mubr.bf16.mxu0 %v746
        %1074 = vmatmul.mubr.bf16.gmra.mrb[0].mxu0 %v745
        %v1075 = vpop.f32.mrb[0].mxu0
        %v1076 = vadd.f32 0.0, %v1075
        %v1077 = vpop.f32.mrb[0].mxu0
        %v1078 = vpop.f32.mrb[0].mxu0
        %v1079 = vadd.f32 0.0, %v1078
        %v1080 = vpop.f32.mrb[0].mxu0
        %1081 = vmatprep.mubr.bf16.mxu0 %v748
        %1082 = vmatmul.mubr.bf16.gmra.mrb[0].mxu0 %v747
        %v1083 = vpop.f32.mrb[0].mxu0
        %v1084 = vadd.f32 0.0, %v1083
        %v1085 = vpop.f32.mrb[0].mxu0
        %v1086 = vpop.f32.mrb[0].mxu0
        %v1087 = vadd.f32 0.0, %v1086
        %v1088 = vpop.f32.mrb[0].mxu0
        %1089 = vmatprep.mubr.bf16.mxu0 %v750
        %1090 = vmatmul.mubr.bf16.gmra.mrb[0].mxu0 %v749
        %v1091 = vpop.f32.mrb[0].mxu0
        %v1092 = vadd.f32 0.0, %v1091
        %v1093 = vpop.f32.mrb[0].mxu0
        %v1094 = vpop.f32.mrb[0].mxu0
        %v1095 = vadd.f32 0.0, %v1094
        %v1096 = vpop.f32.mrb[0].mxu0
        %1097 = vmatprep.mubr.bf16.mxu0 %v752
        %1098 = vmatmul.mubr.bf16.gmra.mrb[0].mxu0 %v751
        %v1099 = vpop.f32.mrb[0].mxu0
        %v1100 = vadd.f32 0.0, %v1099
        %v1101 = vpop.f32.mrb[0].mxu0
        %v1102 = vpop.f32.mrb[0].mxu0
        %v1103 = vadd.f32 0.0, %v1102
        %v1104 = vpop.f32.mrb[0].mxu0
        %1105 = vmatprep.mubr.bf16.mxu0 %v754
        %1106 = vmatmul.mubr.bf16.gmra.mrb[0].mxu0 %v753
        %v1107 = vpop.f32.mrb[0].mxu0
        %v1108 = vadd.f32 0.0, %v1107
        %v1109 = vpop.f32.mrb[0].mxu0
        %v1110 = vpop.f32.mrb[0].mxu0
        %v1111 = vadd.f32 0.0, %v1110
        %v1112 = vpop.f32.mrb[0].mxu0
        %1113 = vmatprep.mubr.bf16.mxu0 %v756
        %1114 = vmatmul.mubr.bf16.gmra.mrb[0].mxu0 %v755
        %v1115 = vpop.f32.mrb[0].mxu0
        %v1116 = vadd.f32 0.0, %v1115
        %v1117 = vpop.f32.mrb[0].mxu0
        %v1118 = vpop.f32.mrb[0].mxu0
        %v1119 = vadd.f32 0.0, %v1118
        %v1120 = vpop.f32.mrb[0].mxu0
        %1121 = vmatprep.mubr.bf16.mxu0 %v758
        %1122 = vmatmul.mubr.bf16.gmra.mrb[0].mxu0 %v757
        %v1123 = vpop.f32.mrb[0].mxu0
        %v1124 = vadd.f32 0.0, %v1123
        %v1125 = vpop.f32.mrb[0].mxu0
        %v1126 = vpop.f32.mrb[0].mxu0
        %v1127 = vadd.f32 0.0, %v1126
        %v1128 = vpop.f32.mrb[0].mxu0
        %1129 = vmatprep.mubr.bf16.mxu0 %v760
        %1130 = vmatmul.mubr.bf16.gmra.mrb[0].mxu0 %v759
        %v1131 = vpop.f32.mrb[0].mxu0
        %v1132 = vadd.f32 0.0, %v1131
        %v1133 = vpop.f32.mrb[0].mxu0
        %v1134 = vpop.f32.mrb[0].mxu0
        %v1135 = vadd.f32 0.0, %v1134
        %v1136 = vpop.f32.mrb[0].mxu0
        %1137 = vmatprep.mubr.bf16.mxu0 %v762
        %1138 = vmatmul.mubr.bf16.gmra.mrb[0].mxu0 %v761
        %v1139 = vpop.f32.mrb[0].mxu0
        %v1140 = vadd.f32 0.0, %v1139
        %v1141 = vpop.f32.mrb[0].mxu0
        %v1142 = vpop.f32.mrb[0].mxu0
        %v1143 = vadd.f32 0.0, %v1142
        %v1144 = vpop.f32.mrb[0].mxu0
        %1145 = vmatprep.mubr.bf16.mxu0 %v764
        %1146 = vmatmul.mubr.bf16.gmra.mrb[0].mxu0 %v763
        %v1147 = vpop.f32.mrb[0].mxu0
        %v1148 = vadd.f32 0.0, %v1147
        %v1149 = vpop.f32.mrb[0].mxu0
        %v1150 = vpop.f32.mrb[0].mxu0
        %v1151 = vadd.f32 0.0, %v1150
        %v1152 = vpop.f32.mrb[0].mxu0
        %1153 = vmatprep.mubr.bf16.mxu0 %v766
        %1154 = vmatmul.mubr.bf16.gmra.mrb[0].mxu0 %v765
        %v1155 = vpop.f32.mrb[0].mxu0
        %v1156 = vadd.f32 0.0, %v1155
        %v1157 = vpop.f32.mrb[0].mxu0
        %v1158 = vpop.f32.mrb[0].mxu0
        %v1159 = vadd.f32 0.0, %v1158
        %v1160 = vpop.f32.mrb[0].mxu0
        %1161 = vmatprep.mubr.bf16.mxu0 %v768
        %1162 = vmatmul.mubr.bf16.gmra.mrb[0].mxu0 %v767
        %v1163 = vpop.f32.mrb[0].mxu0
        %v1164 = vadd.f32 0.0, %v1163
        %v1165 = vpop.f32.mrb[0].mxu0
        %v1166 = vpop.f32.mrb[0].mxu0
        %v1167 = vadd.f32 0.0, %v1166
        %v1168 = vpop.f32.mrb[0].mxu0
        %1169 = vmatprep.mubr.bf16.mxu0 %v770
        %1170 = vmatmul.mubr.bf16.gmra.mrb[0].mxu0 %v769
        %v1171 = vpop.f32.mrb[0].mxu0
        %v1172 = vadd.f32 0.0, %v1171
        %v1173 = vpop.f32.mrb[0].mxu0
        %v1174 = vpop.f32.mrb[0].mxu0
        %v1175 = vadd.f32 0.0, %v1174
        %v1176 = vpop.f32.mrb[0].mxu0
        %1177 = vmatprep.mubr.bf16.mxu0 %v772
        %1178 = vmatmul.mubr.bf16.gmra.mrb[0].mxu0 %v771
        %v1179 = vpop.f32.mrb[0].mxu0
        %v1180 = vadd.f32 0.0, %v1179
        %v1181 = vpop.f32.mrb[0].mxu0
        %v1182 = vpop.f32.mrb[0].mxu0
        %v1183 = vadd.f32 0.0, %v1182
        %v1184 = vpop.f32.mrb[0].mxu0
        %1185 = vmatprep.mubr.bf16.mxu0 %v774
        %1186 = vmatmul.mubr.bf16.gmra.mrb[0].mxu0 %v773
        %v1187 = vpop.f32.mrb[0].mxu0
        %v1188 = vadd.f32 0.0, %v1187
        %v1189 = vpop.f32.mrb[0].mxu0
        %v1190 = vpop.f32.mrb[0].mxu0
        %v1191 = vadd.f32 0.0, %v1190
        %v1192 = vpop.f32.mrb[0].mxu0
        %1193 = vmatprep.mubr.bf16.mxu0 %v776
        %1194 = vmatmul.mubr.bf16.gmra.mrb[0].mxu0 %v775
        %v1195 = vpop.f32.mrb[0].mxu0
        %v1196 = vadd.f32 0.0, %v1195
        %v1197 = vpop.f32.mrb[0].mxu0
        %v1198 = vpop.f32.mrb[0].mxu0
        %v1199 = vadd.f32 0.0, %v1198
        %v1200 = vpop.f32.mrb[0].mxu0
        %1201 = vmatprep.mubr.bf16.mxu0 %v778
        %1202 = vmatmul.mubr.bf16.gmra.mrb[0].mxu0 %v777
        %v1203 = vpop.f32.mrb[0].mxu0
        %v1204 = vadd.f32 0.0, %v1203
        %v1205 = vpop.f32.mrb[0].mxu0
        %v1206 = vpop.f32.mrb[0].mxu0
        %v1207 = vadd.f32 0.0, %v1206
        %v1208 = vpop.f32.mrb[0].mxu0
        %1209 = vmatprep.mubr.bf16.mxu0 %v780
        %1210 = vmatmul.mubr.bf16.gmra.mrb[0].mxu0 %v779
        %v1211 = vpop.f32.mrb[0].mxu0
        %v1212 = vadd.f32 0.0, %v1211
        %v1213 = vpop.f32.mrb[0].mxu0
        %v1214 = vpop.f32.mrb[0].mxu0
        %v1215 = vadd.f32 0.0, %v1214
        %v1216 = vpop.f32.mrb[0].mxu0
        %1217 = vmatprep.mubr.bf16.mxu0 %v782
        %1218 = vmatmul.mubr.bf16.gmra.mrb[0].mxu0 %v781
        %v1219 = vpop.f32.mrb[0].mxu0
        %v1220 = vadd.f32 0.0, %v1219
        %v1221 = vpop.f32.mrb[0].mxu0
        %v1222 = vpop.f32.mrb[0].mxu0
        %v1223 = vadd.f32 0.0, %v1222
        %v1224 = vpop.f32.mrb[0].mxu0
        %1225 = vmatprep.mubr.bf16.mxu0 %v784
        %1226 = vmatmul.mubr.bf16.gmra.mrb[0].mxu0 %v783
        %v1227 = vpop.f32.mrb[0].mxu0
        %v1228 = vadd.f32 0.0, %v1227
        %v1229 = vpop.f32.mrb[0].mxu0
        %v1230 = vpop.f32.mrb[0].mxu0
        %v1231 = vadd.f32 0.0, %v1230
        %v1232 = vpop.f32.mrb[0].mxu0
        %1233 = vdwg.mxu0
        %v1234 = vadd.f32 %v369, %v980
        %v1235 = vadd.f32 %v370, %v983
        %v1236 = vadd.f32 %v371, %v988
        %v1237 = vadd.f32 %v372, %v991
        %v1238 = vadd.f32 %v373, %v996
        %v1239 = vadd.f32 %v374, %v999
        %v1240 = vadd.f32 %v375, %v1004
        %v1241 = vadd.f32 %v376, %v1007
        %v1242 = vadd.f32 %v377, %v1012
        %v1243 = vadd.f32 %v378, %v1015
        %v1244 = vadd.f32 %v379, %v1020
        %v1245 = vadd.f32 %v380, %v1023
        %v1246 = vadd.f32 %v381, %v1028
        %v1247 = vadd.f32 %v382, %v1031
        %v1248 = vadd.f32 %v383, %v1036
        %v1249 = vadd.f32 %v384, %v1039
        %v1250 = vadd.f32 %v385, %v1044
        %v1251 = vadd.f32 %v386, %v1047
        %v1252 = vadd.f32 %v387, %v1052
        %v1253 = vadd.f32 %v388, %v1055
        %v1254 = vadd.f32 %v389, %v1060
        %v1255 = vadd.f32 %v390, %v1063
        %v1256 = vadd.f32 %v391, %v1068
        %v1257 = vadd.f32 %v392, %v1071
        %v1258 = vadd.f32 %v393, %v1076
        %v1259 = vadd.f32 %v394, %v1079
        %v1260 = vadd.f32 %v395, %v1084
        %v1261 = vadd.f32 %v396, %v1087
        %v1262 = vadd.f32 %v397, %v1092
        %v1263 = vadd.f32 %v398, %v1095
        %v1264 = vadd.f32 %v399, %v1100
        %v1265 = vadd.f32 %v400, %v1103
        %v1266 = vadd.f32 %v401, %v1108
        %v1267 = vadd.f32 %v402, %v1111
        %v1268 = vadd.f32 %v403, %v1116
        %v1269 = vadd.f32 %v404, %v1119
        %v1270 = vadd.f32 %v405, %v1124
        %v1271 = vadd.f32 %v406, %v1127
        %v1272 = vadd.f32 %v407, %v1132
        %v1273 = vadd.f32 %v408, %v1135
        %v1274 = vadd.f32 %v409, %v1140
        %v1275 = vadd.f32 %v410, %v1143
        %v1276 = vadd.f32 %v411, %v1148
        %v1277 = vadd.f32 %v412, %v1151
        %v1278 = vadd.f32 %v413, %v1156
        %v1279 = vadd.f32 %v414, %v1159
        %v1280 = vadd.f32 %v415, %v1164
        %v1281 = vadd.f32 %v416, %v1167
        %v1282 = vadd.f32 %v417, %v1172
        %v1283 = vadd.f32 %v418, %v1175
        %v1284 = vadd.f32 %v419, %v1180
        %v1285 = vadd.f32 %v420, %v1183
        %v1286 = vadd.f32 %v421, %v1188
        %v1287 = vadd.f32 %v422, %v1191
        %v1288 = vadd.f32 %v423, %v1196
        %v1289 = vadd.f32 %v424, %v1199
        %v1290 = vadd.f32 %v425, %v1204
        %v1291 = vadd.f32 %v426, %v1207
        %v1292 = vadd.f32 %v427, %v1212
        %v1293 = vadd.f32 %v428, %v1215
        %v1294 = vadd.f32 %v429, %v1220
        %v1295 = vadd.f32 %v430, %v1223
        %v1296 = vadd.f32 %v431, %v1228
        %v1297 = vadd.f32 %v432, %v1231
        %1298 = vst [vmem:[#allocation2] sm:$0xff] %v1234
        %1299 = vst [vmem:[#allocation2 + $0x8] sm:$0xff] %v1235
        %1300 = vst [vmem:[#allocation2 + $0x10] sm:$0xff] %v1236
        %1301 = vst [vmem:[#allocation2 + $0x18] sm:$0xff] %v1237
        %1302 = vst [vmem:[#allocation2 + $0x20] sm:$0xff] %v1238
        %1303 = vst [vmem:[#allocation2 + $0x28] sm:$0xff] %v1239
        %1304 = vst [vmem:[#allocation2 + $0x30] sm:$0xff] %v1240
        %1305 = vst [vmem:[#allocation2 + $0x38] sm:$0xff] %v1241
        %1306 = vst [vmem:[#allocation2 + $0x40] sm:$0xff] %v1242
        %1307 = vst [vmem:[#allocation2 + $0x48] sm:$0xff] %v1243
        %1308 = vst [vmem:[#allocation2 + $0x50] sm:$0xff] %v1244
        %1309 = vst [vmem:[#allocation2 + $0x58] sm:$0xff] %v1245
        %1310 = vst [vmem:[#allocation2 + $0x60] sm:$0xff] %v1246
        %1311 = vst [vmem:[#allocation2 + $0x68] sm:$0xff] %v1247
        %1312 = vst [vmem:[#allocation2 + $0x70] sm:$0xff] %v1248
        %1313 = vst [vmem:[#allocation2 + $0x78] sm:$0xff] %v1249
        %1314 = vst [vmem:[#allocation2 + $0x80] sm:$0xff] %v1250
        %1315 = vst [vmem:[#allocation2 + $0x88] sm:$0xff] %v1251
        %1316 = vst [vmem:[#allocation2 + $0x90] sm:$0xff] %v1252
        %1317 = vst [vmem:[#allocation2 + $0x98] sm:$0xff] %v1253
        %1318 = vst [vmem:[#allocation2 + $0xa0] sm:$0xff] %v1254
        %1319 = vst [vmem:[#allocation2 + $0xa8] sm:$0xff] %v1255
        %1320 = vst [vmem:[#allocation2 + $0xb0] sm:$0xff] %v1256
        %1321 = vst [vmem:[#allocation2 + $0xb8] sm:$0xff] %v1257
        %1322 = vst [vmem:[#allocation2 + $0xc0] sm:$0xff] %v1258
        %1323 = vst [vmem:[#allocation2 + $0xc8] sm:$0xff] %v1259
        %1324 = vst [vmem:[#allocation2 + $0xd0] sm:$0xff] %v1260
        %1325 = vst [vmem:[#allocation2 + $0xd8] sm:$0xff] %v1261
        %1326 = vst [vmem:[#allocation2 + $0xe0] sm:$0xff] %v1262
        %1327 = vst [vmem:[#allocation2 + $0xe8] sm:$0xff] %v1263
        %1328 = vst [vmem:[#allocation2 + $0xf0] sm:$0xff] %v1264
        %1329 = vst [vmem:[#allocation2 + $0xf8] sm:$0xff] %v1265
        %1330 = vst [vmem:[#allocation2 + $0x100] sm:$0xff] %v1266
        %1331 = vst [vmem:[#allocation2 + $0x108] sm:$0xff] %v1267
        %1332 = vst [vmem:[#allocation2 + $0x110] sm:$0xff] %v1268
        %1333 = vst [vmem:[#allocation2 + $0x118] sm:$0xff] %v1269
        %1334 = vst [vmem:[#allocation2 + $0x120] sm:$0xff] %v1270
        %1335 = vst [vmem:[#allocation2 + $0x128] sm:$0xff] %v1271
        %1336 = vst [vmem:[#allocation2 + $0x130] sm:$0xff] %v1272
        %1337 = vst [vmem:[#allocation2 + $0x138] sm:$0xff] %v1273
        %1338 = vst [vmem:[#allocation2 + $0x140] sm:$0xff] %v1274
        %1339 = vst [vmem:[#allocation2 + $0x148] sm:$0xff] %v1275
        %1340 = vst [vmem:[#allocation2 + $0x150] sm:$0xff] %v1276
        %1341 = vst [vmem:[#allocation2 + $0x158] sm:$0xff] %v1277
        %1342 = vst [vmem:[#allocation2 + $0x160] sm:$0xff] %v1278
        %1343 = vst [vmem:[#allocation2 + $0x168] sm:$0xff] %v1279
        %1344 = vst [vmem:[#allocation2 + $0x170] sm:$0xff] %v1280
        %1345 = vst [vmem:[#allocation2 + $0x178] sm:$0xff] %v1281
        %1346 = vst [vmem:[#allocation2 + $0x180] sm:$0xff] %v1282
        %1347 = vst [vmem:[#allocation2 + $0x188] sm:$0xff] %v1283
        %1348 = vst [vmem:[#allocation2 + $0x190] sm:$0xff] %v1284
        %1349 = vst [vmem:[#allocation2 + $0x198] sm:$0xff] %v1285
        %1350 = vst [vmem:[#allocation2 + $0x1a0] sm:$0xff] %v1286
        %1351 = vst [vmem:[#allocation2 + $0x1a8] sm:$0xff] %v1287
        %1352 = vst [vmem:[#allocation2 + $0x1b0] sm:$0xff] %v1288
        %1353 = vst [vmem:[#allocation2 + $0x1b8] sm:$0xff] %v1289
        %1354 = vst [vmem:[#allocation2 + $0x1c0] sm:$0xff] %v1290
        %1355 = vst [vmem:[#allocation2 + $0x1c8] sm:$0xff] %v1291
        %1356 = vst [vmem:[#allocation2 + $0x1d0] sm:$0xff] %v1292
        %1357 = vst [vmem:[#allocation2 + $0x1d8] sm:$0xff] %v1293
        %1358 = vst [vmem:[#allocation2 + $0x1e0] sm:$0xff] %v1294
        %1359 = vst [vmem:[#allocation2 + $0x1e8] sm:$0xff] %v1295
        %1360 = vst [vmem:[#allocation2 + $0x1f0] sm:$0xff] %v1296
        %1361 = vst [vmem:[#allocation2 + $0x1f8] sm:$0xff] %v1297
        // Predicated region
        $region41: #{run.1} parent=35 // pred_check
          %p1362 = pneg %p301
        $region42: #{run.1} parent=35 // pred_check_branch
          %1364 = sbr.rel (%p1362) target = $region44
        $region43: #{run.1} parent=35 // pred_region
          %v1365 = vld [vmem:[#allocation2] sm:$0xff]
          %v1366 = vld [vmem:[#allocation2 + $0x8] sm:$0xff]
          %v1367 = vld [vmem:[#allocation2 + $0x10] sm:$0xff]
          %v1368 = vld [vmem:[#allocation2 + $0x18] sm:$0xff]
          %v1369 = vld [vmem:[#allocation2 + $0x20] sm:$0xff]
          %v1370 = vld [vmem:[#allocation2 + $0x28] sm:$0xff]
          %v1371 = vld [vmem:[#allocation2 + $0x30] sm:$0xff]
          %v1372 = vld [vmem:[#allocation2 + $0x38] sm:$0xff]
          %v1373 = vld [vmem:[#allocation2 + $0x40] sm:$0xff]
          %v1374 = vld [vmem:[#allocation2 + $0x48] sm:$0xff]
          %v1375 = vld [vmem:[#allocation2 + $0x50] sm:$0xff]
          %v1376 = vld [vmem:[#allocation2 + $0x58] sm:$0xff]
          %v1377 = vld [vmem:[#allocation2 + $0x60] sm:$0xff]
          %v1378 = vld [vmem:[#allocation2 + $0x68] sm:$0xff]
          %v1379 = vld [vmem:[#allocation2 + $0x70] sm:$0xff]
          %v1380 = vld [vmem:[#allocation2 + $0x78] sm:$0xff]
          %v1381 = vld [vmem:[#allocation2 + $0x80] sm:$0xff]
          %v1382 = vld [vmem:[#allocation2 + $0x88] sm:$0xff]
          %v1383 = vld [vmem:[#allocation2 + $0x90] sm:$0xff]
          %v1384 = vld [vmem:[#allocation2 + $0x98] sm:$0xff]
          %v1385 = vld [vmem:[#allocation2 + $0xa0] sm:$0xff]
          %v1386 = vld [vmem:[#allocation2 + $0xa8] sm:$0xff]
          %v1387 = vld [vmem:[#allocation2 + $0xb0] sm:$0xff]
          %v1388 = vld [vmem:[#allocation2 + $0xb8] sm:$0xff]
          %v1389 = vld [vmem:[#allocation2 + $0xc0] sm:$0xff]
          %v1390 = vld [vmem:[#allocation2 + $0xc8] sm:$0xff]
          %v1391 = vld [vmem:[#allocation2 + $0xd0] sm:$0xff]
          %v1392 = vld [vmem:[#allocation2 + $0xd8] sm:$0xff]
          %v1393 = vld [vmem:[#allocation2 + $0xe0] sm:$0xff]
          %v1394 = vld [vmem:[#allocation2 + $0xe8] sm:$0xff]
          %v1395 = vld [vmem:[#allocation2 + $0xf0] sm:$0xff]
          %v1396 = vld [vmem:[#allocation2 + $0xf8] sm:$0xff]
          %v1397 = vld [vmem:[#allocation2 + $0x100] sm:$0xff]
          %v1398 = vld [vmem:[#allocation2 + $0x108] sm:$0xff]
          %v1399 = vld [vmem:[#allocation2 + $0x110] sm:$0xff]
          %v1400 = vld [vmem:[#allocation2 + $0x118] sm:$0xff]
          %v1401 = vld [vmem:[#allocation2 + $0x120] sm:$0xff]
          %v1402 = vld [vmem:[#allocation2 + $0x128] sm:$0xff]
          %v1403 = vld [vmem:[#allocation2 + $0x130] sm:$0xff]
          %v1404 = vld [vmem:[#allocation2 + $0x138] sm:$0xff]
          %v1405 = vld [vmem:[#allocation2 + $0x140] sm:$0xff]
          %v1406 = vld [vmem:[#allocation2 + $0x148] sm:$0xff]
          %v1407 = vld [vmem:[#allocation2 + $0x150] sm:$0xff]
          %v1408 = vld [vmem:[#allocation2 + $0x158] sm:$0xff]
          %v1409 = vld [vmem:[#allocation2 + $0x160] sm:$0xff]
          %v1410 = vld [vmem:[#allocation2 + $0x168] sm:$0xff]
          %v1411 = vld [vmem:[#allocation2 + $0x170] sm:$0xff]
          %v1412 = vld [vmem:[#allocation2 + $0x178] sm:$0xff]
          %v1413 = vld [vmem:[#allocation2 + $0x180] sm:$0xff]
          %v1414 = vld [vmem:[#allocation2 + $0x188] sm:$0xff]
          %v1415 = vld [vmem:[#allocation2 + $0x190] sm:$0xff]
          %v1416 = vld [vmem:[#allocation2 + $0x198] sm:$0xff]
          %v1417 = vld [vmem:[#allocation2 + $0x1a0] sm:$0xff]
          %v1418 = vld [vmem:[#allocation2 + $0x1a8] sm:$0xff]
          %v1419 = vld [vmem:[#allocation2 + $0x1b0] sm:$0xff]
          %v1420 = vld [vmem:[#allocation2 + $0x1b8] sm:$0xff]
          %v1421 = vld [vmem:[#allocation2 + $0x1c0] sm:$0xff]
          %v1422 = vld [vmem:[#allocation2 + $0x1c8] sm:$0xff]
          %v1423 = vld [vmem:[#allocation2 + $0x1d0] sm:$0xff]
          %v1424 = vld [vmem:[#allocation2 + $0x1d8] sm:$0xff]
          %v1425 = vld [vmem:[#allocation2 + $0x1e0] sm:$0xff]
          %v1426 = vld [vmem:[#allocation2 + $0x1e8] sm:$0xff]
          %v1427 = vld [vmem:[#allocation2 + $0x1f0] sm:$0xff]
          %v1428 = vld [vmem:[#allocation2 + $0x1f8] sm:$0xff]
          %v1429 = vld [vmem:[%s295] sm:$0x1]
          %v1431 = vlaneseq
          %v1432 = vshrl.u32 %v1431, 7
          %v1433 = vsub.s32 0, %v1432
          %v1434 = vrot.slane %v1429, %v1433
          %v1436 = vmul.f32 %v1365, %v1434
          %v1437 = vmul.f32 %v1366, %v1434
          %v1438 = vmul.f32 %v1367, %v1434
          %v1439 = vmul.f32 %v1368, %v1434
          %v1440 = vmul.f32 %v1369, %v1434
          %v1441 = vmul.f32 %v1370, %v1434
          %v1442 = vmul.f32 %v1371, %v1434
          %v1443 = vmul.f32 %v1372, %v1434
          %v1444 = vmul.f32 %v1373, %v1434
          %v1445 = vmul.f32 %v1374, %v1434
          %v1446 = vmul.f32 %v1375, %v1434
          %v1447 = vmul.f32 %v1376, %v1434
          %v1448 = vmul.f32 %v1377, %v1434
          %v1449 = vmul.f32 %v1378, %v1434
          %v1450 = vmul.f32 %v1379, %v1434
          %v1451 = vmul.f32 %v1380, %v1434
          %v1452 = vmul.f32 %v1381, %v1434
          %v1453 = vmul.f32 %v1382, %v1434
          %v1454 = vmul.f32 %v1383, %v1434
          %v1455 = vmul.f32 %v1384, %v1434
          %v1456 = vmul.f32 %v1385, %v1434
          %v1457 = vmul.f32 %v1386, %v1434
          %v1458 = vmul.f32 %v1387, %v1434
          %v1459 = vmul.f32 %v1388, %v1434
          %v1460 = vmul.f32 %v1389, %v1434
          %v1461 = vmul.f32 %v1390, %v1434
          %v1462 = vmul.f32 %v1391, %v1434
          %v1463 = vmul.f32 %v1392, %v1434
          %v1464 = vmul.f32 %v1393, %v1434
          %v1465 = vmul.f32 %v1394, %v1434
          %v1466 = vmul.f32 %v1395, %v1434
          %v1467 = vmul.f32 %v1396, %v1434
          %v1468 = vmul.f32 %v1397, %v1434
          %v1469 = vmul.f32 %v1398, %v1434
          %v1470 = vmul.f32 %v1399, %v1434
          %v1471 = vmul.f32 %v1400, %v1434
          %v1472 = vmul.f32 %v1401, %v1434
          %v1473 = vmul.f32 %v1402, %v1434
          %v1474 = vmul.f32 %v1403, %v1434
          %v1475 = vmul.f32 %v1404, %v1434
          %v1476 = vmul.f32 %v1405, %v1434
          %v1477 = vmul.f32 %v1406, %v1434
          %v1478 = vmul.f32 %v1407, %v1434
          %v1479 = vmul.f32 %v1408, %v1434
          %v1480 = vmul.f32 %v1409, %v1434
          %v1481 = vmul.f32 %v1410, %v1434
          %v1482 = vmul.f32 %v1411, %v1434
          %v1483 = vmul.f32 %v1412, %v1434
          %v1484 = vmul.f32 %v1413, %v1434
          %v1485 = vmul.f32 %v1414, %v1434
          %v1486 = vmul.f32 %v1415, %v1434
          %v1487 = vmul.f32 %v1416, %v1434
          %v1488 = vmul.f32 %v1417, %v1434
          %v1489 = vmul.f32 %v1418, %v1434
          %v1490 = vmul.f32 %v1419, %v1434
          %v1491 = vmul.f32 %v1420, %v1434
          %v1492 = vmul.f32 %v1421, %v1434
          %v1493 = vmul.f32 %v1422, %v1434
          %v1494 = vmul.f32 %v1423, %v1434
          %v1495 = vmul.f32 %v1424, %v1434
          %v1496 = vmul.f32 %v1425, %v1434
          %v1497 = vmul.f32 %v1426, %v1434
          %v1498 = vmul.f32 %v1427, %v1434
          %v1499 = vmul.f32 %v1428, %v1434
          %v1500 = vld [vmem:[%s298] sm:$0x1]
          %v1502 = vlaneseq
          %v1503 = vshrl.u32 %v1502, 7
          %v1504 = vsub.s32 0, %v1503
          %v1505 = vrot.slane %v1500, %v1504
          %v1507 = vadd.f32 %v1436, %v1505
          %v1508 = vadd.f32 %v1437, %v1505
          %v1509 = vadd.f32 %v1438, %v1505
          %v1510 = vadd.f32 %v1439, %v1505
          %v1511 = vadd.f32 %v1440, %v1505
          %v1512 = vadd.f32 %v1441, %v1505
          %v1513 = vadd.f32 %v1442, %v1505
          %v1514 = vadd.f32 %v1443, %v1505
          %v1515 = vadd.f32 %v1444, %v1505
          %v1516 = vadd.f32 %v1445, %v1505
          %v1517 = vadd.f32 %v1446, %v1505
          %v1518 = vadd.f32 %v1447, %v1505
          %v1519 = vadd.f32 %v1448, %v1505
          %v1520 = vadd.f32 %v1449, %v1505
          %v1521 = vadd.f32 %v1450, %v1505
          %v1522 = vadd.f32 %v1451, %v1505
          %v1523 = vadd.f32 %v1452, %v1505
          %v1524 = vadd.f32 %v1453, %v1505
          %v1525 = vadd.f32 %v1454, %v1505
          %v1526 = vadd.f32 %v1455, %v1505
          %v1527 = vadd.f32 %v1456, %v1505
          %v1528 = vadd.f32 %v1457, %v1505
          %v1529 = vadd.f32 %v1458, %v1505
          %v1530 = vadd.f32 %v1459, %v1505
          %v1531 = vadd.f32 %v1460, %v1505
          %v1532 = vadd.f32 %v1461, %v1505
          %v1533 = vadd.f32 %v1462, %v1505
          %v1534 = vadd.f32 %v1463, %v1505
          %v1535 = vadd.f32 %v1464, %v1505
          %v1536 = vadd.f32 %v1465, %v1505
          %v1537 = vadd.f32 %v1466, %v1505
          %v1538 = vadd.f32 %v1467, %v1505
          %v1539 = vadd.f32 %v1468, %v1505
          %v1540 = vadd.f32 %v1469, %v1505
          %v1541 = vadd.f32 %v1470, %v1505
          %v1542 = vadd.f32 %v1471, %v1505
          %v1543 = vadd.f32 %v1472, %v1505
          %v1544 = vadd.f32 %v1473, %v1505
          %v1545 = vadd.f32 %v1474, %v1505
          %v1546 = vadd.f32 %v1475, %v1505
          %v1547 = vadd.f32 %v1476, %v1505
          %v1548 = vadd.f32 %v1477, %v1505
          %v1549 = vadd.f32 %v1478, %v1505
          %v1550 = vadd.f32 %v1479, %v1505
          %v1551 = vadd.f32 %v1480, %v1505
          %v1552 = vadd.f32 %v1481, %v1505
          %v1553 = vadd.f32 %v1482, %v1505
          %v1554 = vadd.f32 %v1483, %v1505
          %v1555 = vadd.f32 %v1484, %v1505
          %v1556 = vadd.f32 %v1485, %v1505
          %v1557 = vadd.f32 %v1486, %v1505
          %v1558 = vadd.f32 %v1487, %v1505
          %v1559 = vadd.f32 %v1488, %v1505
          %v1560 = vadd.f32 %v1489, %v1505
          %v1561 = vadd.f32 %v1490, %v1505
          %v1562 = vadd.f32 %v1491, %v1505
          %v1563 = vadd.f32 %v1492, %v1505
          %v1564 = vadd.f32 %v1493, %v1505
          %v1565 = vadd.f32 %v1494, %v1505
          %v1566 = vadd.f32 %v1495, %v1505
          %v1567 = vadd.f32 %v1496, %v1505
          %v1568 = vadd.f32 %v1497, %v1505
          %v1569 = vadd.f32 %v1498, %v1505
          %v1570 = vadd.f32 %v1499, %v1505
          %v1571 = vmax.f32 %v1507, 0.0
          %v1572 = vmax.f32 %v1508, 0.0
          %v1573 = vmax.f32 %v1509, 0.0
          %v1574 = vmax.f32 %v1510, 0.0
          %v1575 = vmax.f32 %v1511, 0.0
          %v1576 = vmax.f32 %v1512, 0.0
          %v1577 = vmax.f32 %v1513, 0.0
          %v1578 = vmax.f32 %v1514, 0.0
          %v1579 = vmax.f32 %v1515, 0.0
          %v1580 = vmax.f32 %v1516, 0.0
          %v1581 = vmax.f32 %v1517, 0.0
          %v1582 = vmax.f32 %v1518, 0.0
          %v1583 = vmax.f32 %v1519, 0.0
          %v1584 = vmax.f32 %v1520, 0.0
          %v1585 = vmax.f32 %v1521, 0.0
          %v1586 = vmax.f32 %v1522, 0.0
          %v1587 = vmax.f32 %v1523, 0.0
          %v1588 = vmax.f32 %v1524, 0.0
          %v1589 = vmax.f32 %v1525, 0.0
          %v1590 = vmax.f32 %v1526, 0.0
          %v1591 = vmax.f32 %v1527, 0.0
          %v1592 = vmax.f32 %v1528, 0.0
          %v1593 = vmax.f32 %v1529, 0.0
          %v1594 = vmax.f32 %v1530, 0.0
          %v1595 = vmax.f32 %v1531, 0.0
          %v1596 = vmax.f32 %v1532, 0.0
          %v1597 = vmax.f32 %v1533, 0.0
          %v1598 = vmax.f32 %v1534, 0.0
          %v1599 = vmax.f32 %v1535, 0.0
          %v1600 = vmax.f32 %v1536, 0.0
          %v1601 = vmax.f32 %v1537, 0.0
          %v1602 = vmax.f32 %v1538, 0.0
          %v1603 = vmax.f32 %v1539, 0.0
          %v1604 = vmax.f32 %v1540, 0.0
          %v1605 = vmax.f32 %v1541, 0.0
          %v1606 = vmax.f32 %v1542, 0.0
          %v1607 = vmax.f32 %v1543, 0.0
          %v1608 = vmax.f32 %v1544, 0.0
          %v1609 = vmax.f32 %v1545, 0.0
          %v1610 = vmax.f32 %v1546, 0.0
          %v1611 = vmax.f32 %v1547, 0.0
          %v1612 = vmax.f32 %v1548, 0.0
          %v1613 = vmax.f32 %v1549, 0.0
          %v1614 = vmax.f32 %v1550, 0.0
          %v1615 = vmax.f32 %v1551, 0.0
          %v1616 = vmax.f32 %v1552, 0.0
          %v1617 = vmax.f32 %v1553, 0.0
          %v1618 = vmax.f32 %v1554, 0.0
          %v1619 = vmax.f32 %v1555, 0.0
          %v1620 = vmax.f32 %v1556, 0.0
          %v1621 = vmax.f32 %v1557, 0.0
          %v1622 = vmax.f32 %v1558, 0.0
          %v1623 = vmax.f32 %v1559, 0.0
          %v1624 = vmax.f32 %v1560, 0.0
          %v1625 = vmax.f32 %v1561, 0.0
          %v1626 = vmax.f32 %v1562, 0.0
          %v1627 = vmax.f32 %v1563, 0.0
          %v1628 = vmax.f32 %v1564, 0.0
          %v1629 = vmax.f32 %v1565, 0.0
          %v1630 = vmax.f32 %v1566, 0.0
          %v1631 = vmax.f32 %v1567, 0.0
          %v1632 = vmax.f32 %v1568, 0.0
          %v1633 = vmax.f32 %v1569, 0.0
          %v1634 = vmax.f32 %v1570, 0.0
          %v1635 = vpack.c.bf16 %v1572, %v1571
          %v1636 = vpack.c.bf16 %v1574, %v1573
          %v1637 = vpack.c.bf16 %v1576, %v1575
          %v1638 = vpack.c.bf16 %v1578, %v1577
          %v1639 = vpack.c.bf16 %v1580, %v1579
          %v1640 = vpack.c.bf16 %v1582, %v1581
          %v1641 = vpack.c.bf16 %v1584, %v1583
          %v1642 = vpack.c.bf16 %v1586, %v1585
          %v1643 = vpack.c.bf16 %v1588, %v1587
          %v1644 = vpack.c.bf16 %v1590, %v1589
          %v1645 = vpack.c.bf16 %v1592, %v1591
          %v1646 = vpack.c.bf16 %v1594, %v1593
          %v1647 = vpack.c.bf16 %v1596, %v1595
          %v1648 = vpack.c.bf16 %v1598, %v1597
          %v1649 = vpack.c.bf16 %v1600, %v1599
          %v1650 = vpack.c.bf16 %v1602, %v1601
          %v1651 = vpack.c.bf16 %v1604, %v1603
          %v1652 = vpack.c.bf16 %v1606, %v1605
          %v1653 = vpack.c.bf16 %v1608, %v1607
          %v1654 = vpack.c.bf16 %v1610, %v1609
          %v1655 = vpack.c.bf16 %v1612, %v1611
          %v1656 = vpack.c.bf16 %v1614, %v1613
          %v1657 = vpack.c.bf16 %v1616, %v1615
          %v1658 = vpack.c.bf16 %v1618, %v1617
          %v1659 = vpack.c.bf16 %v1620, %v1619
          %v1660 = vpack.c.bf16 %v1622, %v1621
          %v1661 = vpack.c.bf16 %v1624, %v1623
          %v1662 = vpack.c.bf16 %v1626, %v1625
          %v1663 = vpack.c.bf16 %v1628, %v1627
          %v1664 = vpack.c.bf16 %v1630, %v1629
          %v1665 = vpack.c.bf16 %v1632, %v1631
          %v1666 = vpack.c.bf16 %v1634, %v1633
          %v1699 = vunpack.c.l.b16 %v1635
          %v1700 = vunpack.c.h.b16 %v1635
          %v1701 = vunpack.c.l.b16 %v1636
          %v1702 = vunpack.c.h.b16 %v1636
          %v1703 = vunpack.c.l.b16 %v1637
          %v1704 = vunpack.c.h.b16 %v1637
          %v1705 = vunpack.c.l.b16 %v1638
          %v1706 = vunpack.c.h.b16 %v1638
          %v1707 = vunpack.c.l.b16 %v1639
          %v1708 = vunpack.c.h.b16 %v1639
          %v1709 = vunpack.c.l.b16 %v1640
          %v1710 = vunpack.c.h.b16 %v1640
          %v1711 = vunpack.c.l.b16 %v1641
          %v1712 = vunpack.c.h.b16 %v1641
          %v1713 = vunpack.c.l.b16 %v1642
          %v1714 = vunpack.c.h.b16 %v1642
          %v1715 = vunpack.c.l.b16 %v1643
          %v1716 = vunpack.c.h.b16 %v1643
          %v1717 = vunpack.c.l.b16 %v1644
          %v1718 = vunpack.c.h.b16 %v1644
          %v1719 = vunpack.c.l.b16 %v1645
          %v1720 = vunpack.c.h.b16 %v1645
          %v1721 = vunpack.c.l.b16 %v1646
          %v1722 = vunpack.c.h.b16 %v1646
          %v1723 = vunpack.c.l.b16 %v1647
          %v1724 = vunpack.c.h.b16 %v1647
          %v1725 = vunpack.c.l.b16 %v1648
          %v1726 = vunpack.c.h.b16 %v1648
          %v1727 = vunpack.c.l.b16 %v1649
          %v1728 = vunpack.c.h.b16 %v1649
          %v1729 = vunpack.c.l.b16 %v1650
          %v1730 = vunpack.c.h.b16 %v1650
          %v1731 = vunpack.c.l.b16 %v1651
          %v1732 = vunpack.c.h.b16 %v1651
          %v1733 = vunpack.c.l.b16 %v1652
          %v1734 = vunpack.c.h.b16 %v1652
          %v1735 = vunpack.c.l.b16 %v1653
          %v1736 = vunpack.c.h.b16 %v1653
          %v1737 = vunpack.c.l.b16 %v1654
          %v1738 = vunpack.c.h.b16 %v1654
          %v1739 = vunpack.c.l.b16 %v1655
          %v1740 = vunpack.c.h.b16 %v1655
          %v1741 = vunpack.c.l.b16 %v1656
          %v1742 = vunpack.c.h.b16 %v1656
          %v1743 = vunpack.c.l.b16 %v1657
          %v1744 = vunpack.c.h.b16 %v1657
          %v1745 = vunpack.c.l.b16 %v1658
          %v1746 = vunpack.c.h.b16 %v1658
          %v1747 = vunpack.c.l.b16 %v1659
          %v1748 = vunpack.c.h.b16 %v1659
          %v1749 = vunpack.c.l.b16 %v1660
          %v1750 = vunpack.c.h.b16 %v1660
          %v1751 = vunpack.c.l.b16 %v1661
          %v1752 = vunpack.c.h.b16 %v1661
          %v1753 = vunpack.c.l.b16 %v1662
          %v1754 = vunpack.c.h.b16 %v1662
          %v1755 = vunpack.c.l.b16 %v1663
          %v1756 = vunpack.c.h.b16 %v1663
          %v1757 = vunpack.c.l.b16 %v1664
          %v1758 = vunpack.c.h.b16 %v1664
          %v1759 = vunpack.c.l.b16 %v1665
          %v1760 = vunpack.c.h.b16 %v1665
          %v1761 = vunpack.c.l.b16 %v1666
          %v1762 = vunpack.c.h.b16 %v1666
          %v1763 = vpack.c.b16 %v1699, %v1699
          %v1764 = vpack.c.b16 %v1700, %v1700
          %v1765 = vpack.c.b16 %v1701, %v1701
          %v1766 = vpack.c.b16 %v1702, %v1702
          %v1767 = vpack.c.b16 %v1703, %v1703
          %v1768 = vpack.c.b16 %v1704, %v1704
          %v1769 = vpack.c.b16 %v1705, %v1705
          %v1770 = vpack.c.b16 %v1706, %v1706
          %v1771 = vpack.c.b16 %v1707, %v1707
          %v1772 = vpack.c.b16 %v1708, %v1708
          %v1773 = vpack.c.b16 %v1709, %v1709
          %v1774 = vpack.c.b16 %v1710, %v1710
          %v1775 = vpack.c.b16 %v1711, %v1711
          %v1776 = vpack.c.b16 %v1712, %v1712
          %v1777 = vpack.c.b16 %v1713, %v1713
          %v1778 = vpack.c.b16 %v1714, %v1714
          %v1779 = vpack.c.b16 %v1715, %v1715
          %v1780 = vpack.c.b16 %v1716, %v1716
          %v1781 = vpack.c.b16 %v1717, %v1717
          %v1782 = vpack.c.b16 %v1718, %v1718
          %v1783 = vpack.c.b16 %v1719, %v1719
          %v1784 = vpack.c.b16 %v1720, %v1720
          %v1785 = vpack.c.b16 %v1721, %v1721
          %v1786 = vpack.c.b16 %v1722, %v1722
          %v1787 = vpack.c.b16 %v1723, %v1723
          %v1788 = vpack.c.b16 %v1724, %v1724
          %v1789 = vpack.c.b16 %v1725, %v1725
          %v1790 = vpack.c.b16 %v1726, %v1726
          %v1791 = vpack.c.b16 %v1727, %v1727
          %v1792 = vpack.c.b16 %v1728, %v1728
          %v1793 = vpack.c.b16 %v1729, %v1729
          %v1794 = vpack.c.b16 %v1730, %v1730
          %v1795 = vpack.c.b16 %v1731, %v1731
          %v1796 = vpack.c.b16 %v1732, %v1732
          %v1797 = vpack.c.b16 %v1733, %v1733
          %v1798 = vpack.c.b16 %v1734, %v1734
          %v1799 = vpack.c.b16 %v1735, %v1735
          %v1800 = vpack.c.b16 %v1736, %v1736
          %v1801 = vpack.c.b16 %v1737, %v1737
          %v1802 = vpack.c.b16 %v1738, %v1738
          %v1803 = vpack.c.b16 %v1739, %v1739
          %v1804 = vpack.c.b16 %v1740, %v1740
          %v1805 = vpack.c.b16 %v1741, %v1741
          %v1806 = vpack.c.b16 %v1742, %v1742
          %v1807 = vpack.c.b16 %v1743, %v1743
          %v1808 = vpack.c.b16 %v1744, %v1744
          %v1809 = vpack.c.b16 %v1745, %v1745
          %v1810 = vpack.c.b16 %v1746, %v1746
          %v1811 = vpack.c.b16 %v1747, %v1747
          %v1812 = vpack.c.b16 %v1748, %v1748
          %v1813 = vpack.c.b16 %v1749, %v1749
          %v1814 = vpack.c.b16 %v1750, %v1750
          %v1815 = vpack.c.b16 %v1751, %v1751
          %v1816 = vpack.c.b16 %v1752, %v1752
          %v1817 = vpack.c.b16 %v1753, %v1753
          %v1818 = vpack.c.b16 %v1754, %v1754
          %v1819 = vpack.c.b16 %v1755, %v1755
          %v1820 = vpack.c.b16 %v1756, %v1756
          %v1821 = vpack.c.b16 %v1757, %v1757
          %v1822 = vpack.c.b16 %v1758, %v1758
          %v1823 = vpack.c.b16 %v1759, %v1759
          %v1824 = vpack.c.b16 %v1760, %v1760
          %v1825 = vpack.c.b16 %v1761, %v1761
          %v1826 = vpack.c.b16 %v1762, %v1762
          %1891 = vst [vmem:[%s271] sm:$0xf] %v1763
          %1892 = vst [vmem:[%s271 + $0x4] sm:$0xf] %v1764
          %1893 = vst [vmem:[%s271 + $0x8] sm:$0xf] %v1765
          %1894 = vst [vmem:[%s271 + $0xc] sm:$0xf] %v1766
          %1895 = vst [vmem:[%s271 + $0x10] sm:$0xf] %v1767
          %1896 = vst [vmem:[%s271 + $0x14] sm:$0xf] %v1768
          %1897 = vst [vmem:[%s271 + $0x18] sm:$0xf] %v1769
          %1898 = vst [vmem:[%s271 + $0x1c] sm:$0xf] %v1770
          %1899 = vst [vmem:[%s271 + $0x20] sm:$0xf] %v1771
          %1900 = vst [vmem:[%s271 + $0x24] sm:$0xf] %v1772
          %1901 = vst [vmem:[%s271 + $0x28] sm:$0xf] %v1773
          %1902 = vst [vmem:[%s271 + $0x2c] sm:$0xf] %v1774
          %1903 = vst [vmem:[%s271 + $0x30] sm:$0xf] %v1775
          %1904 = vst [vmem:[%s271 + $0x34] sm:$0xf] %v1776
          %1905 = vst [vmem:[%s271 + $0x38] sm:$0xf] %v1777
          %1906 = vst [vmem:[%s271 + $0x3c] sm:$0xf] %v1778
          %1907 = vst [vmem:[%s271 + $0x40] sm:$0xf] %v1779
          %1908 = vst [vmem:[%s271 + $0x44] sm:$0xf] %v1780
          %1909 = vst [vmem:[%s271 + $0x48] sm:$0xf] %v1781
          %1910 = vst [vmem:[%s271 + $0x4c] sm:$0xf] %v1782
          %1911 = vst [vmem:[%s271 + $0x50] sm:$0xf] %v1783
          %1912 = vst [vmem:[%s271 + $0x54] sm:$0xf] %v1784
          %1913 = vst [vmem:[%s271 + $0x58] sm:$0xf] %v1785
          %1914 = vst [vmem:[%s271 + $0x5c] sm:$0xf] %v1786
          %1915 = vst [vmem:[%s271 + $0x60] sm:$0xf] %v1787
          %1916 = vst [vmem:[%s271 + $0x64] sm:$0xf] %v1788
          %1917 = vst [vmem:[%s271 + $0x68] sm:$0xf] %v1789
          %1918 = vst [vmem:[%s271 + $0x6c] sm:$0xf] %v1790
          %1919 = vst [vmem:[%s271 + $0x70] sm:$0xf] %v1791
          %1920 = vst [vmem:[%s271 + $0x74] sm:$0xf] %v1792
          %1921 = vst [vmem:[%s271 + $0x78] sm:$0xf] %v1793
          %1922 = vst [vmem:[%s271 + $0x7c] sm:$0xf] %v1794
          %1923 = vst [vmem:[%s271 + $0x80] sm:$0xf] %v1795
          %1924 = vst [vmem:[%s271 + $0x84] sm:$0xf] %v1796
          %1925 = vst [vmem:[%s271 + $0x88] sm:$0xf] %v1797
          %1926 = vst [vmem:[%s271 + $0x8c] sm:$0xf] %v1798
          %1927 = vst [vmem:[%s271 + $0x90] sm:$0xf] %v1799
          %1928 = vst [vmem:[%s271 + $0x94] sm:$0xf] %v1800
          %1929 = vst [vmem:[%s271 + $0x98] sm:$0xf] %v1801
          %1930 = vst [vmem:[%s271 + $0x9c] sm:$0xf] %v1802
          %1931 = vst [vmem:[%s271 + $0xa0] sm:$0xf] %v1803
          %1932 = vst [vmem:[%s271 + $0xa4] sm:$0xf] %v1804
          %1933 = vst [vmem:[%s271 + $0xa8] sm:$0xf] %v1805
          %1934 = vst [vmem:[%s271 + $0xac] sm:$0xf] %v1806
          %1935 = vst [vmem:[%s271 + $0xb0] sm:$0xf] %v1807
          %1936 = vst [vmem:[%s271 + $0xb4] sm:$0xf] %v1808
          %1937 = vst [vmem:[%s271 + $0xb8] sm:$0xf] %v1809
          %1938 = vst [vmem:[%s271 + $0xbc] sm:$0xf] %v1810
          %1939 = vst [vmem:[%s271 + $0xc0] sm:$0xf] %v1811
          %1940 = vst [vmem:[%s271 + $0xc4] sm:$0xf] %v1812
          %1941 = vst [vmem:[%s271 + $0xc8] sm:$0xf] %v1813
          %1942 = vst [vmem:[%s271 + $0xcc] sm:$0xf] %v1814
          %1943 = vst [vmem:[%s271 + $0xd0] sm:$0xf] %v1815
          %1944 = vst [vmem:[%s271 + $0xd4] sm:$0xf] %v1816
          %1945 = vst [vmem:[%s271 + $0xd8] sm:$0xf] %v1817
          %1946 = vst [vmem:[%s271 + $0xdc] sm:$0xf] %v1818
          %1947 = vst [vmem:[%s271 + $0xe0] sm:$0xf] %v1819
          %1948 = vst [vmem:[%s271 + $0xe4] sm:$0xf] %v1820
          %1949 = vst [vmem:[%s271 + $0xe8] sm:$0xf] %v1821
          %1950 = vst [vmem:[%s271 + $0xec] sm:$0xf] %v1822
          %1951 = vst [vmem:[%s271 + $0xf0] sm:$0xf] %v1823
          %1952 = vst [vmem:[%s271 + $0xf4] sm:$0xf] %v1824
          %1953 = vst [vmem:[%s271 + $0xf8] sm:$0xf] %v1825
          %1954 = vst [vmem:[%s271 + $0xfc] sm:$0xf] %v1826
        $region44: #{run.1} parent=35 // pred_fallthru
          _
        %s1955 = sand.u32 %s155, 1
        %s1956 = scalar_lea.sflag [#allocation4], %s1955
        %s1957 = sand.u32 %s155, 1
        %s1958 = smul.addr %s1957, 256
        %s1959 = scalar_lea.vmem [#allocation3], %s1958
        // Predicated region
        $region45: #{run.1} parent=35 // pred_check
          %p1960 = pneg %p165
        $region46: #{run.1} parent=35 // pred_check_branch
          %1962 = sbr.rel (%p1960) target = $region48
        $region47: #{run.1} parent=35 // pred_region
          %s1963 = smul.u32 64, %s23
          %s1965 = ssub.s32 4096, 4096
          %1966 = vsyncadd %s1956, %s1965
          %s1967 = sadd.s32 %s24, %s1963
          %s1968 = smul.addr %s1967, 64
          %s1969 = scalar_lea.hbm %s4, %s1968
          %s1970 = sshll.u32 %s1959, 4
          %s1971 = int_to_ptr.vmem [resolvable:$true] %s1970
          %1976 = dma.vmem_to_hbm [thread:$0]  %s1971, 4096, %s1969, %s1956, 64, 64, 4
        $region48: #{run.1} parent=35 // pred_fallthru
          _
      $region36: #{run.1} parent=5 // pred_fallthru
        _
      %p1977 = scmp.le.s32.totalorder 2, %s13
      // Predicated region
      $region49: #{run.1} parent=5 // pred_check
        %p1978 = pneg %p1977
      $region50: #{run.1} parent=5 // pred_check_branch
        %1980 = sbr.rel (%p1978) target = $region52
      $region51: #{run.1} parent=5 // pred_region
        %s1981 = ssub.s32 %s13, 2
        // Predicated region
        $region53: #{run.1} parent=51 // pred_check
          %p1982 = pneg %p171
        $region54: #{run.1} parent=51 // pred_check_branch
          %1984 = sbr.rel (%p1982) target = $region56
        $region55: #{run.1} parent=51 // pred_region
          %s1985 = sand.u32 %s156, 1
          %s1986 = scalar_lea.sflag [#allocation4], %s1985
          %s1987 = sand.u32 %s156, 1
          %s1988 = smul.addr %s1987, 256
          %s1989 = scalar_lea.vmem [#allocation3], %s1988
          %1990 = dma.done %s1986, 4096
        $region56: #{run.1} parent=51 // pred_fallthru
          _
      $region52: #{run.1} parent=5 // pred_fallthru
        _
    $region6: #{run.1} parent=1 // loop_footer
      %s17 = sadd.s32 1, %s13
    $region7: #{run.1} parent=1 // loop_footer_branch
      %12 = sbr.rel target = $region3
    $region8: #{run.1} parent=1 // loop_exit
      _
    %1991 = vsyncpa [#allocation4], 1
    %s1992 = scalar_lea.sflag [#allocation4], 1
    %1993 = vsyncpa %s1992, 1

</llo_original>
